<compile_context>
chip_gen: v7x
topology: tpu7x:2x2x1
jax: 0.10.0
libtpu: 0.0.40
codegen_flags: <defaults>
</compile_context>

<pallas_src>
import jax
import jax.numpy as jnp
import numpy as np
from jax.experimental import pallas as pl
from jax.experimental.pallas import tpu as pltpu

LEAKY_SLOPE = 0.2
BN_EPS = 1e-5


# ----------------------------- kernel helpers -----------------------------
def _leaky_relu(x):
    return jnp.where(x >= 0, x, LEAKY_SLOPE * x)


def _batchnorm_train(x2, gamma, beta):
    """BatchNorm1d, training mode, over the B*L rows — single-sweep statistics.

    gamma/beta: (1, C).  Biased variance via E[x^2] - mean^2 (one reduction
    pass instead of two), clamped at 0 for numerical safety.
    """
    n = x2.shape[0]
    inv_n = 1.0 / n
    mean = jnp.sum(x2, axis=0, keepdims=True) * inv_n
    mean_sq = jnp.sum(x2 * x2, axis=0, keepdims=True) * inv_n
    var = jnp.maximum(mean_sq - mean * mean, 0.0)
    return (x2 - mean) * (gamma * jax.lax.rsqrt(var + BN_EPS)) + beta


# -------------------------------- kernel ----------------------------------
def _disc_kernel(x_ref, w1_ref, w2_ref, w3_ref, w4_ref, w5_ref,
                 g2_ref, be2_ref, g3_ref, be3_ref, g4_ref, be4_ref,
                 g5_ref, be5_ref, wl_ref, bl_ref,
                 cls_ref, feat_ref):
    B, L, Cin = x_ref.shape
    N = B * L

    # Boundary masks hoisted out of the conv helper: a single (N, 1) iota is
    # reused by all five convolutions (JAX does not CSE broadcast_in_dim).
    lidx = jax.lax.broadcasted_iota(jnp.int32, (N, 1), 0) % L
    first_row = lidx == 0            # l == 0     -> zero the x[l-1] tap
    last_row = lidx == (L - 1)       # l == L - 1 -> zero the x[l+1] tap

    def conv(x2, w_ref):
        """'same' Conv1d(k=3) as ONE bf16 MXU matmul: (N, 3*Cin) @ (3*Cin, Cout)."""
        xm = jnp.where(first_row, 0.0, pltpu.roll(x2, shift=1, axis=0))      # x[l-1]
        xp = jnp.where(last_row, 0.0, pltpu.roll(x2, shift=N - 1, axis=0))   # x[l+1]
        xcat = jnp.concatenate([xm, x2, xp], axis=1).astype(jnp.bfloat16)
        return jnp.dot(xcat, w_ref[...], preferred_element_type=jnp.float32)

    h = x_ref[...].reshape(N, Cin)

    # layer 1: conv + leaky relu
    h = _leaky_relu(conv(h, w1_ref))
    # layers 2..5: conv + batchnorm(train) + leaky relu
    h = _leaky_relu(_batchnorm_train(conv(h, w2_ref), g2_ref[...], be2_ref[...]))
    h = _leaky_relu(_batchnorm_train(conv(h, w3_ref), g3_ref[...], be3_ref[...]))
    h = _leaky_relu(_batchnorm_train(conv(h, w4_ref), g4_ref[...], be4_ref[...]))
    h = _leaky_relu(_batchnorm_train(conv(h, w5_ref), g5_ref[...], be5_ref[...]))

    C5 = h.shape[1]
    h3 = h.reshape(B, L, C5)

    # Features in PyTorch (B, C5, L) layout — transposed in-kernel (XLU slot)
    # so the caller does not pay an extra HBM read+write for the relayout.
    feat_ref[...] = jnp.swapaxes(h3, 1, 2)

    # classifier: Linear(C5*L -> 1) + Sigmoid.  PyTorch's channel-major flatten
    # order of features.view(B, -1) is already folded into the (L, C5) layout
    # of wl.  Scalar bias comes from SMEM; reciprocal goes to the EUP.
    prod = h3 * wl_ref[...][None, :, :]                          # (B, L, C5)
    s = jnp.sum(jnp.sum(prod, axis=2), axis=1, keepdims=True)    # (B, 1)
    logit = s + bl_ref[0, 0]
    cls_ref[...] = pl.reciprocal(1.0 + jnp.exp(-logit), approx=True)


# -------------------------------- wrapper ----------------------------------
def discriminator_cnn_forward(x, params):
    """x: (B, seq_len, x_dim) float32 — same convention as the PyTorch module."""
    B, L, _ = x.shape
    assert L % 8 == 0, "seq_len must be a multiple of 8 (sublane) for the in-kernel reshapes"
    C5 = params["w5"].shape[2]

    def conv_w(w):   # (3, Cin, Cout) f32 -> (3*Cin, Cout) bf16 for the fused matmul
        k, cin, cout = w.shape
        return w.reshape(k * cin, cout).astype(jnp.bfloat16)

    args = (x,
            conv_w(params["w1"]), conv_w(params["w2"]), conv_w(params["w3"]),
            conv_w(params["w4"]), conv_w(params["w5"]),
            params["g2"], params["b2"], params["g3"], params["b3"],
            params["g4"], params["b4"], params["g5"], params["b5"],
            params["wl"], params["bl"])

    vmem = pl.BlockSpec(memory_space=pltpu.MemorySpace.VMEM)
    smem = pl.BlockSpec(memory_space=pltpu.MemorySpace.SMEM)
    in_specs = [vmem] * (len(args) - 1) + [smem]      # scalar bias lives in SMEM

    # VMEM budget sized from the actual footprint + headroom instead of an
    # unconditional 64 MiB (which is the entire per-TC VMEM on v7x); capped at
    # 48 MiB so it stays v7x-safe.
    max_c = max(params[f"w{i}"].shape[2] for i in range(1, 6))
    act_bytes = B * L * max_c * 4
    feat_bytes = B * C5 * L * 4
    w_bytes = sum(int(np.prod(a.shape)) * a.dtype.itemsize for a in args)
    vmem_need = 8 * act_bytes + 2 * feat_bytes + 2 * w_bytes + (4 << 20)
    vmem_limit = int(min(max(vmem_need, 16 << 20), 48 << 20))

    # TODO(synk): for large B*L*C5 (e.g. B=64, L=256, h_dim=64) this whole-tensor
    # design should be tiled over B with a two-pass BatchNorm (or eval-mode
    # running stats) and a ("parallel", ...) grid so both v7x TensorCores are used.
    cls, feats = pl.pallas_call(
        _disc_kernel,
        out_shape=(jax.ShapeDtypeStruct((B, 1), jnp.float32),
                   jax.ShapeDtypeStruct((B, C5, L), jnp.float32)),
        in_specs=in_specs,
        out_specs=(vmem, vmem),
        compiler_params=pltpu.CompilerParams(vmem_limit_bytes=vmem_limit),
    )(*args)
    return cls, feats


# --------------------------- parameter creation -----------------------------
def init_params(key, x_dim, h_dim, seq_len):
    chans = [x_dim, h_dim, h_dim * 2, h_dim * 4, h_dim * 8, h_dim * 16]
    keys = jax.random.split(key, 16)
    params = {}
    for i in range(5):
        cin, cout = chans[i], chans[i + 1]
        # kernel layout (3, Cin, Cout); the PyTorch weight is its (Cout, Cin, 3) transpose
        params[f"w{i+1}"] = (0.3 / np.sqrt(3 * cin)) * jax.random.normal(
            keys[i], (3, cin, cout), dtype=jnp.float32)
    for i in range(2, 6):
        c = chans[i]
        params[f"g{i}"] = 1.0 + 0.1 * jax.random.normal(keys[3 + i], (1, c), dtype=jnp.float32)
        params[f"b{i}"] = 0.1 * jax.random.normal(keys[7 + i], (1, c), dtype=jnp.float32)
    c5 = chans[5]
    wl_pt = (0.05 / np.sqrt(c5 * seq_len)) * jax.random.normal(
        keys[13], (1, c5 * seq_len), dtype=jnp.float32)   # PyTorch Linear weight (1, C5*L)
    bl_pt = 0.1 * jax.random.normal(keys[14], (1,), dtype=jnp.float32)
    params["wl_pt"] = wl_pt
    params["bl_pt"] = bl_pt
    params["wl"] = wl_pt.reshape(c5, seq_len).T           # kernel layout (L, C5)
    params["bl"] = bl_pt.reshape(1, 1)
    return params


# ------------------------- pure-JAX reference model -------------------------
def reference_forward(x, params):
    B = x.shape[0]
    h = jnp.transpose(x, (0, 2, 1))                       # (B, C, L) like input.permute(0,2,1)

    def conv(h, w_kernel_layout):
        w_pt = jnp.transpose(w_kernel_layout, (2, 1, 0))  # (Cout, Cin, 3)
        return jax.lax.conv_general_dilated(
            h, w_pt, window_strides=(1,), padding=[(1, 1)],
            dimension_numbers=("NCH", "OIH", "NCH"),
            precision=jax.lax.Precision.HIGHEST)

    def bn(h, g, b):
        mean = jnp.mean(h, axis=(0, 2), keepdims=True)
        var = jnp.mean((h - mean) ** 2, axis=(0, 2), keepdims=True)
        return (h - mean) * jax.lax.rsqrt(var + BN_EPS) * g[0][None, :, None] + b[0][None, :, None]

    def lrelu(h):
        return jnp.where(h >= 0, h, LEAKY_SLOPE * h)

    h = lrelu(conv(h, params["w1"]))
    h = lrelu(bn(conv(h, params["w2"]), params["g2"], params["b2"]))
    h = lrelu(bn(conv(h, params["w3"]), params["g3"], params["b3"]))
    h = lrelu(bn(conv(h, params["w4"]), params["g4"], params["b4"]))
    h = lrelu(bn(conv(h, params["w5"]), params["g5"], params["b5"]))
    feats = h                                             # (B, C5, L)
    flat = feats.reshape(B, -1)                           # channel-major (PyTorch .view)
    logit = jnp.dot(flat, params["wl_pt"].T,
                    precision=jax.lax.Precision.HIGHEST) + params["bl_pt"]
    return jax.nn.sigmoid(logit), feats


if __name__ == "__main__":
    B, x_dim, h_dim, seq_len = 2, 4, 8, 8                 # z_dim unused in forward
    key = jax.random.PRNGKey(0)
    kx, kp = jax.random.split(key)
    x = jax.random.normal(kx, (B, seq_len, x_dim), dtype=jnp.float32)
    params = init_params(kp, x_dim, h_dim, seq_len)

    cls, feats = discriminator_cnn_forward(x, params)
    (cls, feats) = jax.block_until_ready((cls, feats))

    cls_ref, feats_ref = reference_forward(x, params)
    assert cls.shape == (B, 1)
    assert feats.shape == (B, h_dim * 16, seq_len)
    assert bool(jnp.all(jnp.isfinite(cls))) and bool(jnp.all(jnp.isfinite(feats)))
    # bf16 MXU inputs with f32 accumulation vs an f32 'highest'-precision reference.
    np.testing.assert_allclose(np.asarray(cls), np.asarray(cls_ref), atol=5e-2, rtol=0)
    np.testing.assert_allclose(np.asarray(feats), np.asarray(feats_ref), atol=5e-2, rtol=5e-2)
    print("KERNEL_OK")
</pallas_src>

<mosaic_0001>
module attributes {stable_mosaic.version = 11 : i64} {
  func.func @_disc_kernel(%arg0: memref<2x8x4xf32, #tpu.memory_space<vmem>>, %arg1: memref<12x8xbf16, #tpu.memory_space<vmem>>, %arg2: memref<24x16xbf16, #tpu.memory_space<vmem>>, %arg3: memref<48x32xbf16, #tpu.memory_space<vmem>>, %arg4: memref<96x64xbf16, #tpu.memory_space<vmem>>, %arg5: memref<192x128xbf16, #tpu.memory_space<vmem>>, %arg6: memref<1x16xf32, #tpu.memory_space<vmem>>, %arg7: memref<1x16xf32, #tpu.memory_space<vmem>>, %arg8: memref<1x32xf32, #tpu.memory_space<vmem>>, %arg9: memref<1x32xf32, #tpu.memory_space<vmem>>, %arg10: memref<1x64xf32, #tpu.memory_space<vmem>>, %arg11: memref<1x64xf32, #tpu.memory_space<vmem>>, %arg12: memref<1x128xf32, #tpu.memory_space<vmem>>, %arg13: memref<1x128xf32, #tpu.memory_space<vmem>>, %arg14: memref<8x128xf32, #tpu.memory_space<vmem>>, %arg15: memref<1x1xf32, #tpu.memory_space<smem>>, %arg16: memref<2x1xf32, #tpu.memory_space<vmem>>, %arg17: memref<2x128x8xf32, #tpu.memory_space<vmem>>) attributes {dimension_semantics = [], scalar_prefetch = 0 : i64, scratch_operands = 0 : i64, tpu.core_type = #tpu.core_type<tc>} {
    %0 = tpu.iota {dimensions = array<i32: 0>} : vector<16x1xi32>
    %c8_i32 = arith.constant 8 : i32
    %c0_i32 = arith.constant 0 : i32
    %1 = arith.cmpi eq, %c8_i32, %c0_i32 : i32
    %c1_i32 = arith.constant 1 : i32
    %2 = arith.select %1, %c1_i32, %c8_i32 : i32
    %3 = vector.broadcast %2 : i32 to vector<16x1xi32>
    %4 = arith.remsi %0, %3 : vector<16x1xi32>
    %c0_i32_0 = arith.constant 0 : i32
    %5 = vector.broadcast %c0_i32_0 : i32 to vector<16x1xi32>
    %6 = arith.cmpi ne, %4, %5 : vector<16x1xi32>
    %c0_i32_1 = arith.constant 0 : i32
    %7 = vector.broadcast %c0_i32_1 : i32 to vector<16x1xi32>
    %8 = arith.cmpi slt, %4, %7 : vector<16x1xi32>
    %c0_i32_2 = arith.constant 0 : i32
    %9 = arith.cmpi slt, %2, %c0_i32_2 : i32
    %10 = vector.broadcast %9 : i1 to vector<16x1xi1>
    %11 = vector.broadcast %10 : vector<16x1xi1> to vector<16x1xi1>
    %12 = arith.xori %8, %11 : vector<16x1xi1>
    %13 = arith.andi %12, %6 : vector<16x1xi1>
    %14 = vector.broadcast %2 : i32 to vector<16x1xi32>
    %15 = arith.addi %4, %14 : vector<16x1xi32>
    %16 = arith.select %13, %15, %4 : vector<16x1xi1>, vector<16x1xi32>
    %c0_i32_3 = arith.constant 0 : i32
    %17 = vector.broadcast %c0_i32_3 : i32 to vector<16x1xi32>
    %18 = arith.cmpi eq, %16, %17 : vector<16x1xi32>
    %c7_i32 = arith.constant 7 : i32
    %19 = vector.broadcast %c7_i32 : i32 to vector<16x1xi32>
    %20 = arith.cmpi eq, %16, %19 : vector<16x1xi32>
    %c0 = arith.constant 0 : index
    %c0_4 = arith.constant 0 : index
    %c0_5 = arith.constant 0 : index
    %21 = vector.load %arg0[%c0, %c0_4, %c0_5] : memref<2x8x4xf32, #tpu.memory_space<vmem>>, vector<2x8x4xf32>
    %22 = vector.shape_cast %21 : vector<2x8x4xf32> to vector<16x4xf32>
    %c1_i32_6 = arith.constant 1 : i32
    %23 = tpu.dynamic_rotate %22 by %c1_i32_6 dim 0 : vector<16x4xf32>, i32 -> vector<16x4xf32>
    %cst = arith.constant 0.000000e+00 : f32
    %24 = vector.shape_cast %18 : vector<16x1xi1> to vector<16x1xi1>
    %25 = vector.broadcast %24 : vector<16x1xi1> to vector<16x4xi1>
    %26 = vector.broadcast %cst : f32 to vector<16x4xf32>
    %27 = arith.select %25, %26, %23 : vector<16x4xi1>, vector<16x4xf32>
    %c15_i32 = arith.constant 15 : i32
    %28 = tpu.dynamic_rotate %22 by %c15_i32 dim 0 : vector<16x4xf32>, i32 -> vector<16x4xf32>
    %cst_7 = arith.constant 0.000000e+00 : f32
    %29 = vector.shape_cast %20 : vector<16x1xi1> to vector<16x1xi1>
    %30 = vector.broadcast %29 : vector<16x1xi1> to vector<16x4xi1>
    %31 = vector.broadcast %cst_7 : f32 to vector<16x4xf32>
    %32 = arith.select %30, %31, %28 : vector<16x4xi1>, vector<16x4xf32>
    %33 = tpu.concatenate %27, %22, %32 in 1 : vector<16x4xf32>, vector<16x4xf32>, vector<16x4xf32> -> vector<16x12xf32>
    %34 = arith.truncf %33 : vector<16x12xf32> to vector<16x12xbf16>
    %c0_8 = arith.constant 0 : index
    %c0_9 = arith.constant 0 : index
    %35 = vector.load %arg1[%c0_8, %c0_9] : memref<12x8xbf16, #tpu.memory_space<vmem>>, vector<12x8xbf16>
    %cst_10 = arith.constant dense<0.000000e+00> : vector<16x8xf32>
    %36 = tpu.matmul %34, %35, %cst_10 {dimension_numbers = #tpu.dot_dimension_numbers<[1], [0], [0], [1], [0, 0, 1, 1], [], []>} : vector<16x12xbf16>, vector<12x8xbf16>, vector<16x8xf32> -> vector<16x8xf32>
    %cst_11 = arith.constant 0.000000e+00 : f32
    %37 = vector.broadcast %cst_11 : f32 to vector<16x8xf32>
    %38 = arith.cmpf oge, %36, %37 : vector<16x8xf32>
    %cst_12 = arith.constant 2.000000e-01 : f32
    %39 = vector.broadcast %cst_12 : f32 to vector<16x8xf32>
    %40 = arith.mulf %39, %36 : vector<16x8xf32>
    %41 = arith.select %38, %36, %40 : vector<16x8xi1>, vector<16x8xf32>
    %c1_i32_13 = arith.constant 1 : i32
    %42 = tpu.dynamic_rotate %41 by %c1_i32_13 dim 0 : vector<16x8xf32>, i32 -> vector<16x8xf32>
    %cst_14 = arith.constant 0.000000e+00 : f32
    %43 = vector.shape_cast %18 : vector<16x1xi1> to vector<16x1xi1>
    %44 = vector.broadcast %43 : vector<16x1xi1> to vector<16x8xi1>
    %45 = vector.broadcast %cst_14 : f32 to vector<16x8xf32>
    %46 = arith.select %44, %45, %42 : vector<16x8xi1>, vector<16x8xf32>
    %c15_i32_15 = arith.constant 15 : i32
    %47 = tpu.dynamic_rotate %41 by %c15_i32_15 dim 0 : vector<16x8xf32>, i32 -> vector<16x8xf32>
    %cst_16 = arith.constant 0.000000e+00 : f32
    %48 = vector.shape_cast %20 : vector<16x1xi1> to vector<16x1xi1>
    %49 = vector.broadcast %48 : vector<16x1xi1> to vector<16x8xi1>
    %50 = vector.broadcast %cst_16 : f32 to vector<16x8xf32>
    %51 = arith.select %49, %50, %47 : vector<16x8xi1>, vector<16x8xf32>
    %52 = tpu.concatenate %46, %41, %51 in 1 : vector<16x8xf32>, vector<16x8xf32>, vector<16x8xf32> -> vector<16x24xf32>
    %53 = arith.truncf %52 : vector<16x24xf32> to vector<16x24xbf16>
    %c0_17 = arith.constant 0 : index
    %c0_18 = arith.constant 0 : index
    %54 = vector.load %arg2[%c0_17, %c0_18] : memref<24x16xbf16, #tpu.memory_space<vmem>>, vector<24x16xbf16>
    %cst_19 = arith.constant dense<0.000000e+00> : vector<16x16xf32>
    %55 = tpu.matmul %53, %54, %cst_19 {dimension_numbers = #tpu.dot_dimension_numbers<[1], [0], [0], [1], [0, 0, 1, 1], [], []>} : vector<16x24xbf16>, vector<24x16xbf16>, vector<16x16xf32> -> vector<16x16xf32>
    %c0_20 = arith.constant 0 : index
    %c0_21 = arith.constant 0 : index
    %56 = vector.load %arg6[%c0_20, %c0_21] : memref<1x16xf32, #tpu.memory_space<vmem>>, vector<1x16xf32>
    %c0_22 = arith.constant 0 : index
    %c0_23 = arith.constant 0 : index
    %57 = vector.load %arg7[%c0_22, %c0_23] : memref<1x16xf32, #tpu.memory_space<vmem>>, vector<1x16xf32>
    %cst_24 = arith.constant dense<0.000000e+00> : vector<16xf32>
    %58 = vector.multi_reduction <add>, %55, %cst_24 [0] : vector<16x16xf32> to vector<16xf32>
    %59 = vector.shape_cast %58 : vector<16xf32> to vector<1x16xf32>
    %cst_25 = arith.constant 6.250000e-02 : f32
    %60 = vector.broadcast %cst_25 : f32 to vector<1x16xf32>
    %61 = arith.mulf %59, %60 : vector<1x16xf32>
    %62 = arith.mulf %55, %55 : vector<16x16xf32>
    %cst_26 = arith.constant dense<0.000000e+00> : vector<16xf32>
    %63 = vector.multi_reduction <add>, %62, %cst_26 [0] : vector<16x16xf32> to vector<16xf32>
    %64 = vector.shape_cast %63 : vector<16xf32> to vector<1x16xf32>
    %cst_27 = arith.constant 6.250000e-02 : f32
    %65 = vector.broadcast %cst_27 : f32 to vector<1x16xf32>
    %66 = arith.mulf %64, %65 : vector<1x16xf32>
    %67 = arith.mulf %61, %61 : vector<1x16xf32>
    %68 = arith.subf %66, %67 : vector<1x16xf32>
    %cst_28 = arith.constant 0.000000e+00 : f32
    %69 = vector.broadcast %cst_28 : f32 to vector<1x16xf32>
    %70 = arith.maximumf %68, %69 : vector<1x16xf32>
    %71 = vector.broadcast %61 : vector<1x16xf32> to vector<16x16xf32>
    %72 = arith.subf %55, %71 : vector<16x16xf32>
    %cst_29 = arith.constant 9.99999974E-6 : f32
    %73 = vector.broadcast %cst_29 : f32 to vector<1x16xf32>
    %74 = arith.addf %70, %73 : vector<1x16xf32>
    %75 = math.rsqrt %74 : vector<1x16xf32>
    %76 = arith.mulf %56, %75 : vector<1x16xf32>
    %77 = vector.broadcast %76 : vector<1x16xf32> to vector<16x16xf32>
    %78 = arith.mulf %72, %77 : vector<16x16xf32>
    %79 = vector.broadcast %57 : vector<1x16xf32> to vector<16x16xf32>
    %80 = arith.addf %78, %79 : vector<16x16xf32>
    %cst_30 = arith.constant 0.000000e+00 : f32
    %81 = vector.broadcast %cst_30 : f32 to vector<16x16xf32>
    %82 = arith.cmpf oge, %80, %81 : vector<16x16xf32>
    %cst_31 = arith.constant 2.000000e-01 : f32
    %83 = vector.broadcast %cst_31 : f32 to vector<16x16xf32>
    %84 = arith.mulf %83, %80 : vector<16x16xf32>
    %85 = arith.select %82, %80, %84 : vector<16x16xi1>, vector<16x16xf32>
    %c1_i32_32 = arith.constant 1 : i32
    %86 = tpu.dynamic_rotate %85 by %c1_i32_32 dim 0 : vector<16x16xf32>, i32 -> vector<16x16xf32>
    %cst_33 = arith.constant 0.000000e+00 : f32
    %87 = vector.shape_cast %18 : vector<16x1xi1> to vector<16x1xi1>
    %88 = vector.broadcast %87 : vector<16x1xi1> to vector<16x16xi1>
    %89 = vector.broadcast %cst_33 : f32 to vector<16x16xf32>
    %90 = arith.select %88, %89, %86 : vector<16x16xi1>, vector<16x16xf32>
    %c15_i32_34 = arith.constant 15 : i32
    %91 = tpu.dynamic_rotate %85 by %c15_i32_34 dim 0 : vector<16x16xf32>, i32 -> vector<16x16xf32>
    %cst_35 = arith.constant 0.000000e+00 : f32
    %92 = vector.shape_cast %20 : vector<16x1xi1> to vector<16x1xi1>
    %93 = vector.broadcast %92 : vector<16x1xi1> to vector<16x16xi1>
    %94 = vector.broadcast %cst_35 : f32 to vector<16x16xf32>
    %95 = arith.select %93, %94, %91 : vector<16x16xi1>, vector<16x16xf32>
    %96 = tpu.concatenate %90, %85, %95 in 1 : vector<16x16xf32>, vector<16x16xf32>, vector<16x16xf32> -> vector<16x48xf32>
    %97 = arith.truncf %96 : vector<16x48xf32> to vector<16x48xbf16>
    %c0_36 = arith.constant 0 : index
    %c0_37 = arith.constant 0 : index
    %98 = vector.load %arg3[%c0_36, %c0_37] : memref<48x32xbf16, #tpu.memory_space<vmem>>, vector<48x32xbf16>
    %cst_38 = arith.constant dense<0.000000e+00> : vector<16x32xf32>
    %99 = tpu.matmul %97, %98, %cst_38 {dimension_numbers = #tpu.dot_dimension_numbers<[1], [0], [0], [1], [0, 0, 1, 1], [], []>} : vector<16x48xbf16>, vector<48x32xbf16>, vector<16x32xf32> -> vector<16x32xf32>
    %c0_39 = arith.constant 0 : index
    %c0_40 = arith.constant 0 : index
    %100 = vector.load %arg8[%c0_39, %c0_40] : memref<1x32xf32, #tpu.memory_space<vmem>>, vector<1x32xf32>
    %c0_41 = arith.constant 0 : index
    %c0_42 = arith.constant 0 : index
    %101 = vector.load %arg9[%c0_41, %c0_42] : memref<1x32xf32, #tpu.memory_space<vmem>>, vector<1x32xf32>
    %cst_43 = arith.constant dense<0.000000e+00> : vector<32xf32>
    %102 = vector.multi_reduction <add>, %99, %cst_43 [0] : vector<16x32xf32> to vector<32xf32>
    %103 = vector.shape_cast %102 : vector<32xf32> to vector<1x32xf32>
    %cst_44 = arith.constant 6.250000e-02 : f32
    %104 = vector.broadcast %cst_44 : f32 to vector<1x32xf32>
    %105 = arith.mulf %103, %104 : vector<1x32xf32>
    %106 = arith.mulf %99, %99 : vector<16x32xf32>
    %cst_45 = arith.constant dense<0.000000e+00> : vector<32xf32>
    %107 = vector.multi_reduction <add>, %106, %cst_45 [0] : vector<16x32xf32> to vector<32xf32>
    %108 = vector.shape_cast %107 : vector<32xf32> to vector<1x32xf32>
    %cst_46 = arith.constant 6.250000e-02 : f32
    %109 = vector.broadcast %cst_46 : f32 to vector<1x32xf32>
    %110 = arith.mulf %108, %109 : vector<1x32xf32>
    %111 = arith.mulf %105, %105 : vector<1x32xf32>
    %112 = arith.subf %110, %111 : vector<1x32xf32>
    %cst_47 = arith.constant 0.000000e+00 : f32
    %113 = vector.broadcast %cst_47 : f32 to vector<1x32xf32>
    %114 = arith.maximumf %112, %113 : vector<1x32xf32>
    %115 = vector.broadcast %105 : vector<1x32xf32> to vector<16x32xf32>
    %116 = arith.subf %99, %115 : vector<16x32xf32>
    %cst_48 = arith.constant 9.99999974E-6 : f32
    %117 = vector.broadcast %cst_48 : f32 to vector<1x32xf32>
    %118 = arith.addf %114, %117 : vector<1x32xf32>
    %119 = math.rsqrt %118 : vector<1x32xf32>
    %120 = arith.mulf %100, %119 : vector<1x32xf32>
    %121 = vector.broadcast %120 : vector<1x32xf32> to vector<16x32xf32>
    %122 = arith.mulf %116, %121 : vector<16x32xf32>
    %123 = vector.broadcast %101 : vector<1x32xf32> to vector<16x32xf32>
    %124 = arith.addf %122, %123 : vector<16x32xf32>
    %cst_49 = arith.constant 0.000000e+00 : f32
    %125 = vector.broadcast %cst_49 : f32 to vector<16x32xf32>
    %126 = arith.cmpf oge, %124, %125 : vector<16x32xf32>
    %cst_50 = arith.constant 2.000000e-01 : f32
    %127 = vector.broadcast %cst_50 : f32 to vector<16x32xf32>
    %128 = arith.mulf %127, %124 : vector<16x32xf32>
    %129 = arith.select %126, %124, %128 : vector<16x32xi1>, vector<16x32xf32>
    %c1_i32_51 = arith.constant 1 : i32
    %130 = tpu.dynamic_rotate %129 by %c1_i32_51 dim 0 : vector<16x32xf32>, i32 -> vector<16x32xf32>
    %cst_52 = arith.constant 0.000000e+00 : f32
    %131 = vector.shape_cast %18 : vector<16x1xi1> to vector<16x1xi1>
    %132 = vector.broadcast %131 : vector<16x1xi1> to vector<16x32xi1>
    %133 = vector.broadcast %cst_52 : f32 to vector<16x32xf32>
    %134 = arith.select %132, %133, %130 : vector<16x32xi1>, vector<16x32xf32>
    %c15_i32_53 = arith.constant 15 : i32
    %135 = tpu.dynamic_rotate %129 by %c15_i32_53 dim 0 : vector<16x32xf32>, i32 -> vector<16x32xf32>
    %cst_54 = arith.constant 0.000000e+00 : f32
    %136 = vector.shape_cast %20 : vector<16x1xi1> to vector<16x1xi1>
    %137 = vector.broadcast %136 : vector<16x1xi1> to vector<16x32xi1>
    %138 = vector.broadcast %cst_54 : f32 to vector<16x32xf32>
    %139 = arith.select %137, %138, %135 : vector<16x32xi1>, vector<16x32xf32>
    %140 = tpu.concatenate %134, %129, %139 in 1 : vector<16x32xf32>, vector<16x32xf32>, vector<16x32xf32> -> vector<16x96xf32>
    %141 = arith.truncf %140 : vector<16x96xf32> to vector<16x96xbf16>
    %c0_55 = arith.constant 0 : index
    %c0_56 = arith.constant 0 : index
    %142 = vector.load %arg4[%c0_55, %c0_56] : memref<96x64xbf16, #tpu.memory_space<vmem>>, vector<96x64xbf16>
    %cst_57 = arith.constant dense<0.000000e+00> : vector<16x64xf32>
    %143 = tpu.matmul %141, %142, %cst_57 {dimension_numbers = #tpu.dot_dimension_numbers<[1], [0], [0], [1], [0, 0, 1, 1], [], []>} : vector<16x96xbf16>, vector<96x64xbf16>, vector<16x64xf32> -> vector<16x64xf32>
    %c0_58 = arith.constant 0 : index
    %c0_59 = arith.constant 0 : index
    %144 = vector.load %arg10[%c0_58, %c0_59] : memref<1x64xf32, #tpu.memory_space<vmem>>, vector<1x64xf32>
    %c0_60 = arith.constant 0 : index
    %c0_61 = arith.constant 0 : index
    %145 = vector.load %arg11[%c0_60, %c0_61] : memref<1x64xf32, #tpu.memory_space<vmem>>, vector<1x64xf32>
    %cst_62 = arith.constant dense<0.000000e+00> : vector<64xf32>
    %146 = vector.multi_reduction <add>, %143, %cst_62 [0] : vector<16x64xf32> to vector<64xf32>
    %147 = vector.shape_cast %146 : vector<64xf32> to vector<1x64xf32>
    %cst_63 = arith.constant 6.250000e-02 : f32
    %148 = vector.broadcast %cst_63 : f32 to vector<1x64xf32>
    %149 = arith.mulf %147, %148 : vector<1x64xf32>
    %150 = arith.mulf %143, %143 : vector<16x64xf32>
    %cst_64 = arith.constant dense<0.000000e+00> : vector<64xf32>
    %151 = vector.multi_reduction <add>, %150, %cst_64 [0] : vector<16x64xf32> to vector<64xf32>
    %152 = vector.shape_cast %151 : vector<64xf32> to vector<1x64xf32>
    %cst_65 = arith.constant 6.250000e-02 : f32
    %153 = vector.broadcast %cst_65 : f32 to vector<1x64xf32>
    %154 = arith.mulf %152, %153 : vector<1x64xf32>
    %155 = arith.mulf %149, %149 : vector<1x64xf32>
    %156 = arith.subf %154, %155 : vector<1x64xf32>
    %cst_66 = arith.constant 0.000000e+00 : f32
    %157 = vector.broadcast %cst_66 : f32 to vector<1x64xf32>
    %158 = arith.maximumf %156, %157 : vector<1x64xf32>
    %159 = vector.broadcast %149 : vector<1x64xf32> to vector<16x64xf32>
    %160 = arith.subf %143, %159 : vector<16x64xf32>
    %cst_67 = arith.constant 9.99999974E-6 : f32
    %161 = vector.broadcast %cst_67 : f32 to vector<1x64xf32>
    %162 = arith.addf %158, %161 : vector<1x64xf32>
    %163 = math.rsqrt %162 : vector<1x64xf32>
    %164 = arith.mulf %144, %163 : vector<1x64xf32>
    %165 = vector.broadcast %164 : vector<1x64xf32> to vector<16x64xf32>
    %166 = arith.mulf %160, %165 : vector<16x64xf32>
    %167 = vector.broadcast %145 : vector<1x64xf32> to vector<16x64xf32>
    %168 = arith.addf %166, %167 : vector<16x64xf32>
    %cst_68 = arith.constant 0.000000e+00 : f32
    %169 = vector.broadcast %cst_68 : f32 to vector<16x64xf32>
    %170 = arith.cmpf oge, %168, %169 : vector<16x64xf32>
    %cst_69 = arith.constant 2.000000e-01 : f32
    %171 = vector.broadcast %cst_69 : f32 to vector<16x64xf32>
    %172 = arith.mulf %171, %168 : vector<16x64xf32>
    %173 = arith.select %170, %168, %172 : vector<16x64xi1>, vector<16x64xf32>
    %c1_i32_70 = arith.constant 1 : i32
    %174 = tpu.dynamic_rotate %173 by %c1_i32_70 dim 0 : vector<16x64xf32>, i32 -> vector<16x64xf32>
    %cst_71 = arith.constant 0.000000e+00 : f32
    %175 = vector.shape_cast %18 : vector<16x1xi1> to vector<16x1xi1>
    %176 = vector.broadcast %175 : vector<16x1xi1> to vector<16x64xi1>
    %177 = vector.broadcast %cst_71 : f32 to vector<16x64xf32>
    %178 = arith.select %176, %177, %174 : vector<16x64xi1>, vector<16x64xf32>
    %c15_i32_72 = arith.constant 15 : i32
    %179 = tpu.dynamic_rotate %173 by %c15_i32_72 dim 0 : vector<16x64xf32>, i32 -> vector<16x64xf32>
    %cst_73 = arith.constant 0.000000e+00 : f32
    %180 = vector.shape_cast %20 : vector<16x1xi1> to vector<16x1xi1>
    %181 = vector.broadcast %180 : vector<16x1xi1> to vector<16x64xi1>
    %182 = vector.broadcast %cst_73 : f32 to vector<16x64xf32>
    %183 = arith.select %181, %182, %179 : vector<16x64xi1>, vector<16x64xf32>
    %184 = tpu.concatenate %178, %173, %183 in 1 : vector<16x64xf32>, vector<16x64xf32>, vector<16x64xf32> -> vector<16x192xf32>
    %185 = arith.truncf %184 : vector<16x192xf32> to vector<16x192xbf16>
    %c0_74 = arith.constant 0 : index
    %c0_75 = arith.constant 0 : index
    %186 = vector.load %arg5[%c0_74, %c0_75] : memref<192x128xbf16, #tpu.memory_space<vmem>>, vector<192x128xbf16>
    %cst_76 = arith.constant dense<0.000000e+00> : vector<16x128xf32>
    %187 = tpu.matmul %185, %186, %cst_76 {dimension_numbers = #tpu.dot_dimension_numbers<[1], [0], [0], [1], [0, 0, 1, 1], [], []>} : vector<16x192xbf16>, vector<192x128xbf16>, vector<16x128xf32> -> vector<16x128xf32>
    %c0_77 = arith.constant 0 : index
    %c0_78 = arith.constant 0 : index
    %188 = vector.load %arg12[%c0_77, %c0_78] : memref<1x128xf32, #tpu.memory_space<vmem>>, vector<1x128xf32>
    %c0_79 = arith.constant 0 : index
    %c0_80 = arith.constant 0 : index
    %189 = vector.load %arg13[%c0_79, %c0_80] : memref<1x128xf32, #tpu.memory_space<vmem>>, vector<1x128xf32>
    %cst_81 = arith.constant dense<0.000000e+00> : vector<128xf32>
    %190 = vector.multi_reduction <add>, %187, %cst_81 [0] : vector<16x128xf32> to vector<128xf32>
    %191 = vector.shape_cast %190 : vector<128xf32> to vector<1x128xf32>
    %cst_82 = arith.constant 6.250000e-02 : f32
    %192 = vector.broadcast %cst_82 : f32 to vector<1x128xf32>
    %193 = arith.mulf %191, %192 : vector<1x128xf32>
    %194 = arith.mulf %187, %187 : vector<16x128xf32>
    %cst_83 = arith.constant dense<0.000000e+00> : vector<128xf32>
    %195 = vector.multi_reduction <add>, %194, %cst_83 [0] : vector<16x128xf32> to vector<128xf32>
    %196 = vector.shape_cast %195 : vector<128xf32> to vector<1x128xf32>
    %cst_84 = arith.constant 6.250000e-02 : f32
    %197 = vector.broadcast %cst_84 : f32 to vector<1x128xf32>
    %198 = arith.mulf %196, %197 : vector<1x128xf32>
    %199 = arith.mulf %193, %193 : vector<1x128xf32>
    %200 = arith.subf %198, %199 : vector<1x128xf32>
    %cst_85 = arith.constant 0.000000e+00 : f32
    %201 = vector.broadcast %cst_85 : f32 to vector<1x128xf32>
    %202 = arith.maximumf %200, %201 : vector<1x128xf32>
    %203 = vector.broadcast %193 : vector<1x128xf32> to vector<16x128xf32>
    %204 = arith.subf %187, %203 : vector<16x128xf32>
    %cst_86 = arith.constant 9.99999974E-6 : f32
    %205 = vector.broadcast %cst_86 : f32 to vector<1x128xf32>
    %206 = arith.addf %202, %205 : vector<1x128xf32>
    %207 = math.rsqrt %206 : vector<1x128xf32>
    %208 = arith.mulf %188, %207 : vector<1x128xf32>
    %209 = vector.broadcast %208 : vector<1x128xf32> to vector<16x128xf32>
    %210 = arith.mulf %204, %209 : vector<16x128xf32>
    %211 = vector.broadcast %189 : vector<1x128xf32> to vector<16x128xf32>
    %212 = arith.addf %210, %211 : vector<16x128xf32>
    %cst_87 = arith.constant 0.000000e+00 : f32
    %213 = vector.broadcast %cst_87 : f32 to vector<16x128xf32>
    %214 = arith.cmpf oge, %212, %213 : vector<16x128xf32>
    %cst_88 = arith.constant 2.000000e-01 : f32
    %215 = vector.broadcast %cst_88 : f32 to vector<16x128xf32>
    %216 = arith.mulf %215, %212 : vector<16x128xf32>
    %217 = arith.select %214, %212, %216 : vector<16x128xi1>, vector<16x128xf32>
    %218 = vector.shape_cast %217 : vector<16x128xf32> to vector<2x8x128xf32>
    %219 = tpu.transpose %218, [0, 2, 1] : vector<2x8x128xf32> -> vector<2x128x8xf32>
    %c0_89 = arith.constant 0 : index
    %c0_90 = arith.constant 0 : index
    %c0_91 = arith.constant 0 : index
    %220 = vector.load %arg17[%c0_89, %c0_90, %c0_91] : memref<2x128x8xf32, #tpu.memory_space<vmem>>, vector<2x128x8xf32>
    tpu.vector_store %arg17[%c0_89, %c0_90, %c0_91], %219 {strides = array<i32>} : memref<2x128x8xf32, #tpu.memory_space<vmem>>, vector<2x128x8xf32>,
    %c0_92 = arith.constant 0 : index
    %c0_93 = arith.constant 0 : index
    %221 = vector.load %arg14[%c0_92, %c0_93] : memref<8x128xf32, #tpu.memory_space<vmem>>, vector<8x128xf32>
    %222 = vector.shape_cast %221 : vector<8x128xf32> to vector<1x8x128xf32>
    %223 = vector.broadcast %222 : vector<1x8x128xf32> to vector<2x8x128xf32>
    %224 = arith.mulf %218, %223 : vector<2x8x128xf32>
    %cst_94 = arith.constant dense<0.000000e+00> : vector<2x8xf32>
    %225 = vector.multi_reduction <add>, %224, %cst_94 [2] : vector<2x8x128xf32> to vector<2x8xf32>
    %cst_95 = arith.constant dense<0.000000e+00> : vector<2xf32>
    %226 = vector.multi_reduction <add>, %225, %cst_95 [1] : vector<2x8xf32> to vector<2xf32>
    %227 = vector.shape_cast %226 : vector<2xf32> to vector<2x1xf32>
    %c0_96 = arith.constant 0 : index
    %c0_97 = arith.constant 0 : index
    %228 = memref.load %arg15[%c0_96, %c0_97] : memref<1x1xf32, #tpu.memory_space<smem>>
    %229 = vector.broadcast %228 : f32 to vector<2x1xf32>
    %230 = arith.addf %227, %229 : vector<2x1xf32>
    %cst_98 = arith.constant 0.000000e+00 : f32
    %231 = vector.broadcast %cst_98 : f32 to vector<2x1xf32>
    %232 = arith.subf %231, %230 : vector<2x1xf32>
    %233 = math.exp %232 : vector<2x1xf32>
    %cst_99 = arith.constant 1.000000e+00 : f32
    %234 = vector.broadcast %cst_99 : f32 to vector<2x1xf32>
    %235 = arith.addf %234, %233 : vector<2x1xf32>
    %236 = tpu.reciprocal %235 {approx = true} : vector<2x1xf32> -> vector<2x1xf32>
    %c0_100 = arith.constant 0 : index
    %c0_101 = arith.constant 0 : index
    %237 = vector.load %arg16[%c0_100, %c0_101] : memref<2x1xf32, #tpu.memory_space<vmem>>, vector<2x1xf32>
    tpu.vector_store %arg16[%c0_100, %c0_101], %236 {strides = array<i32>} : memref<2x1xf32, #tpu.memory_space<vmem>>, vector<2x1xf32>,
    return
  }
}

</mosaic_0001>

<llo_original>
// kernel: tpu_custom_call.1
$region0: #{tpu_custom_call.1}
  #allocation0 [shape = 'u32[]', space=smem, size = 0x4, offset = 0x4, fixed_abs, tag = 'smem constant byte address 0x4 - core index']
  #allocation1 [shape = 'u32[144,128]{1,0:T(1,128)}', space=vmem, size = 0x12000, scoped, tag = 'internal scratch']
  #allocation2 [shape = 'f32[1,1]{1,0:T(1,128)S(6)}', space=smem, size = 0x200, scoped, tag = 'scoped memory for tpu_custom_call.1']
  %s0 = inlined_call_operand.vmem [shape: f32[2,8,4], index: 0, kind: input, shape index: {}]
  %s1 = inlined_call_operand.vmem [shape: bf16[12,8], index: 1, kind: input, shape index: {}]
  %s2 = inlined_call_operand.vmem [shape: bf16[24,16], index: 2, kind: input, shape index: {}]
  %s3 = inlined_call_operand.vmem [shape: bf16[48,32], index: 3, kind: input, shape index: {}]
  %s4 = inlined_call_operand.vmem [shape: bf16[96,64], index: 4, kind: input, shape index: {}]
  %s5 = inlined_call_operand.vmem [shape: bf16[192,128], index: 5, kind: input, shape index: {}]
  %s6 = inlined_call_operand.vmem [shape: f32[1,16], index: 6, kind: input, shape index: {}]
  %s7 = inlined_call_operand.vmem [shape: f32[1,16], index: 7, kind: input, shape index: {}]
  %s8 = inlined_call_operand.vmem [shape: f32[1,32], index: 8, kind: input, shape index: {}]
  %s9 = inlined_call_operand.vmem [shape: f32[1,32], index: 9, kind: input, shape index: {}]
  %s10 = inlined_call_operand.vmem [shape: f32[1,64], index: 10, kind: input, shape index: {}]
  %s11 = inlined_call_operand.vmem [shape: f32[1,64], index: 11, kind: input, shape index: {}]
  %s12 = inlined_call_operand.vmem [shape: f32[1,128], index: 12, kind: input, shape index: {}]
  %s13 = inlined_call_operand.vmem [shape: f32[1,128], index: 13, kind: input, shape index: {}]
  %s14 = inlined_call_operand.vmem [shape: f32[8,128], index: 14, kind: input, shape index: {}]
  %s15 = inlined_call_operand.<no memory space> [shape: f32[1,1], index: 15, kind: input, shape index: {}]
  %s16 = inlined_call_operand.vmem [shape: f32[2,1], index: 16, kind: output, shape index: {0}]
  %s17 = inlined_call_operand.vmem [shape: f32[2,128,8], index: 17, kind: output, shape index: {1}]
  %18 = xla_tuple %s16, %s17
  %s19 = sld [smem:[#allocation0]]
  $region82: #{tpu_custom_call.1} parent=0
    _
  %s21 = ssub.s32 1, %s19
  %s22 = scalar_select 0, %s21, %s19
  %23 = sst [smem:[#allocation2]] %s15
  // Predicated region
  $region2: #{tpu_custom_call.1} parent=0 // pred_check
    _
  $region3: #{tpu_custom_call.1} parent=0 // pred_check_branch
    %25 = sbr.rel (0) target = $region5
  $region4: #{tpu_custom_call.1} parent=0 // pred_region
    _
  $region5: #{tpu_custom_call.1} parent=0 // pred_fallthru
    _
  // Predicated region
  $region6: #{tpu_custom_call.1} parent=0 // pred_check
    _
  $region7: #{tpu_custom_call.1} parent=0 // pred_check_branch
    %27 = sbr.rel (0) target = $region9
  $region8: #{tpu_custom_call.1} parent=0 // pred_region
    _
  $region9: #{tpu_custom_call.1} parent=0 // pred_fallthru
    _
  // Predicated region
  $region10: #{tpu_custom_call.1} parent=0 // pred_check
    _
  $region11: #{tpu_custom_call.1} parent=0 // pred_check_branch
    %29 = sbr.rel (0) target = $region13
  $region12: #{tpu_custom_call.1} parent=0 // pred_region
    _
  $region13: #{tpu_custom_call.1} parent=0 // pred_fallthru
    _
  // Predicated region
  $region14: #{tpu_custom_call.1} parent=0 // pred_check
    _
  $region15: #{tpu_custom_call.1} parent=0 // pred_check_branch
    %31 = sbr.rel (0) target = $region17
  $region16: #{tpu_custom_call.1} parent=0 // pred_region
    _
  $region17: #{tpu_custom_call.1} parent=0 // pred_fallthru
    _
  // Predicated region
  $region18: #{tpu_custom_call.1} parent=0 // pred_check
    _
  $region19: #{tpu_custom_call.1} parent=0 // pred_check_branch
    %33 = sbr.rel (0) target = $region21
  $region20: #{tpu_custom_call.1} parent=0 // pred_region
    _
  $region21: #{tpu_custom_call.1} parent=0 // pred_fallthru
    _
  // Predicated region
  $region22: #{tpu_custom_call.1} parent=0 // pred_check
    _
  $region23: #{tpu_custom_call.1} parent=0 // pred_check_branch
    %35 = sbr.rel (0) target = $region25
  $region24: #{tpu_custom_call.1} parent=0 // pred_region
    _
  $region25: #{tpu_custom_call.1} parent=0 // pred_fallthru
    _
  // Predicated region
  $region26: #{tpu_custom_call.1} parent=0 // pred_check
    _
  $region27: #{tpu_custom_call.1} parent=0 // pred_check_branch
    %37 = sbr.rel (0) target = $region29
  $region28: #{tpu_custom_call.1} parent=0 // pred_region
    _
  $region29: #{tpu_custom_call.1} parent=0 // pred_fallthru
    _
  // Predicated region
  $region30: #{tpu_custom_call.1} parent=0 // pred_check
    _
  $region31: #{tpu_custom_call.1} parent=0 // pred_check_branch
    %39 = sbr.rel (0) target = $region33
  $region32: #{tpu_custom_call.1} parent=0 // pred_region
    _
  $region33: #{tpu_custom_call.1} parent=0 // pred_fallthru
    _
  // Predicated region
  $region34: #{tpu_custom_call.1} parent=0 // pred_check
    _
  $region35: #{tpu_custom_call.1} parent=0 // pred_check_branch
    %41 = sbr.rel (0) target = $region37
  $region36: #{tpu_custom_call.1} parent=0 // pred_region
    _
  $region37: #{tpu_custom_call.1} parent=0 // pred_fallthru
    _
  // Predicated region
  $region38: #{tpu_custom_call.1} parent=0 // pred_check
    _
  $region39: #{tpu_custom_call.1} parent=0 // pred_check_branch
    %43 = sbr.rel (0) target = $region41
  $region40: #{tpu_custom_call.1} parent=0 // pred_region
    _
  $region41: #{tpu_custom_call.1} parent=0 // pred_fallthru
    _
  // Predicated region
  $region42: #{tpu_custom_call.1} parent=0 // pred_check
    _
  $region43: #{tpu_custom_call.1} parent=0 // pred_check_branch
    %45 = sbr.rel (0) target = $region45
  $region44: #{tpu_custom_call.1} parent=0 // pred_region
    _
  $region45: #{tpu_custom_call.1} parent=0 // pred_fallthru
    _
  // Predicated region
  $region46: #{tpu_custom_call.1} parent=0 // pred_check
    _
  $region47: #{tpu_custom_call.1} parent=0 // pred_check_branch
    %47 = sbr.rel (0) target = $region49
  $region48: #{tpu_custom_call.1} parent=0 // pred_region
    _
  $region49: #{tpu_custom_call.1} parent=0 // pred_fallthru
    _
  // Predicated region
  $region50: #{tpu_custom_call.1} parent=0 // pred_check
    _
  $region51: #{tpu_custom_call.1} parent=0 // pred_check_branch
    %49 = sbr.rel (0) target = $region53
  $region52: #{tpu_custom_call.1} parent=0 // pred_region
    _
  $region53: #{tpu_custom_call.1} parent=0 // pred_fallthru
    _
  // Predicated region
  $region54: #{tpu_custom_call.1} parent=0 // pred_check
    _
  $region55: #{tpu_custom_call.1} parent=0 // pred_check_branch
    %51 = sbr.rel (0) target = $region57
  $region56: #{tpu_custom_call.1} parent=0 // pred_region
    _
  $region57: #{tpu_custom_call.1} parent=0 // pred_fallthru
    _
  // Predicated region
  $region58: #{tpu_custom_call.1} parent=0 // pred_check
    _
  $region59: #{tpu_custom_call.1} parent=0 // pred_check_branch
    %53 = sbr.rel (0) target = $region61
  $region60: #{tpu_custom_call.1} parent=0 // pred_region
    _
  $region61: #{tpu_custom_call.1} parent=0 // pred_fallthru
    _
  // Predicated region
  $region62: #{tpu_custom_call.1} parent=0 // pred_check
    _
  $region63: #{tpu_custom_call.1} parent=0 // pred_check_branch
    %55 = sbr.rel (0) target = $region65
  $region64: #{tpu_custom_call.1} parent=0 // pred_region
    _
  $region65: #{tpu_custom_call.1} parent=0 // pred_fallthru
    _
  %v57 = vlaneseq
  %v58 = vshrl.u32 %v57, 7
  %v59 = vadd.s32 %v58, 8
  %vm60 = vcmp.lt.s32.totalorder %v58, 0
  %v61 = vsub.s32 0, %v58
  %v62 = vsel %vm60, %v61, %v58
  %v63 = vshrl.u32 %v62, 3
  %v64 = vand.u32 %v62, 7
  %v65 = vsub.s32 0, %v64
  %v66 = vsel %vm60, %v65, %v64
  %vm67 = vcmp.lt.s32.totalorder %v59, 0
  %v68 = vsub.s32 0, %v59
  %v69 = vsel %vm67, %v68, %v59
  %v70 = vshrl.u32 %v69, 3
  %v71 = vand.u32 %v69, 7
  %v72 = vsub.s32 0, %v71
  %v73 = vsel %vm67, %v72, %v71
  %vm74 = vcmp.ne.s32.totalorder %v66, 0
  %vm75 = vcmp.ne.s32.totalorder %v73, 0
  %vm76 = vcmp.lt.s32.totalorder %v66, 0
  %vm77 = vcmp.lt.s32.totalorder %v73, 0
  %vm78 = vmand %vm76, %vm74
  %vm79 = vmand %vm77, %vm75
  %v80 = vadd.s32 %v66, 8
  %v81 = vadd.s32 %v73, 8
  %v82 = vsel %vm78, %v80, %v66
  %v83 = vsel %vm79, %v81, %v73
  %vm84 = vcmp.eq.s32.totalorder %v82, 0
  %vm85 = vcmp.eq.s32.totalorder %v83, 0
  %vm86 = vcmp.eq.s32.totalorder %v82, 7
  %vm87 = vcmp.eq.s32.totalorder %v83, 7
  %v88 = vld [vmem:[%s0] sm:$0xff]
  %v89 = vld [vmem:[%s0 + $0x8] sm:$0xff]
  %v90 = vrot.slane %v88, 7
  %v91 = vrot.slane %v89, 7
  %vm92 = vcmp.lt.s32.totalorder %v58, 1
  %v93 = vsel %vm92, %v90, %v91
  %v94 = vsel %vm92, %v91, %v90
  %v95 = vsel %vm84, 1, 0
  %v96 = vsel %vm85, 1, 0
  %vm97 = vcmp.eq.s32.totalorder %v95, 1
  %vm98 = vcmp.eq.s32.totalorder %v96, 1
  %v99 = vsel %vm97, 0.0, %v94
  %v100 = vsel %vm98, 0.0, %v93
  %v101 = vrot.slane %v88, 1
  %v102 = vrot.slane %v89, 1
  %vm103 = vcmp.lt.s32.totalorder %v58, 7
  %v104 = vsel %vm103, %v101, %v102
  %v105 = vsel %vm103, %v102, %v101
  %v106 = vsel %vm86, 1, 0
  %v107 = vsel %vm87, 1, 0
  %vm108 = vcmp.eq.s32.totalorder %v106, 1
  %vm109 = vcmp.eq.s32.totalorder %v107, 1
  %v110 = vsel %vm108, 0.0, %v104
  %v111 = vsel %vm109, 0.0, %v105
  %114 = vrot.lane.b32.xlu0 %v88, 4
  %v115 = vpop.permute.xlu0 %114
  %116 = vrot.lane.b32.xlu0 %v89, 4
  %v117 = vpop.permute.xlu0 %116
  %122 = vrot.lane.b32.xlu0 %v110, 8
  %v123 = vpop.permute.xlu0 %122
  %124 = vrot.lane.b32.xlu0 %v111, 8
  %v125 = vpop.permute.xlu0 %124
  %vm128 = vcmask 31744
  %v129 = vsel %vm128, %v99, %v115
  %v130 = vsel %vm128, %v100, %v117
  %vm131 = vcmask 64512
  %v132 = vsel %vm131, %v129, %v123
  %v133 = vsel %vm131, %v130, %v125
  %v134 = vpack.c.bf16 %v133, %v132
  %v135 = vld [vmem:[%s1] sm:$0xf]
  %v136 = vld [vmem:[%s1 + $0x4] sm:$0x3]
  %v139 = vunpack.c.l.b16 %v135
  %v140 = vunpack.c.l.b16 %v136
  %v141 = vpack.c.b16 %v140, %v139
  %vm142 = vcmask 97280
  %v144 = vsel %vm142, %v134, 0
  %vm146 = vcmask 1045504
  %v148 = vsel %vm146, %v141, 0
  %150 = vmatprep.subr.bf16.mxu0 0
  %151 = vmatpush1.bf16.msra.mxu0 %v148
  %152 = vmatprep.subr.bf16.mxu0 0
  %153 = vmatpush1.bf16.msra.mxu0 0
  %154 = vmatprep.subr.bf16.mxu0 0
  %155 = vmatpush1.bf16.msra.mxu0 0
  %156 = vmatprep.subr.bf16.mxu0 0
  %157 = vmatpush1.bf16.msra.mxu0 0
  %158 = vmatprep.subr.bf16.mxu0 0
  %159 = vmatpush1.bf16.msra.mxu0 0
  %160 = vmatprep.subr.bf16.mxu0 0
  %161 = vmatpush1.bf16.msra.mxu0 0
  %162 = vmatprep.subr.bf16.mxu0 0
  %163 = vmatpush1.bf16.msra.mxu0 0
  %164 = vmatprep.subr.bf16.mxu0 0
  %165 = vmatpush1.bf16.msra.mxu0 0
  %166 = vmatprep.subr.bf16.mxu0 0
  %167 = vmatpush1.bf16.msra.mxu0 0
  %168 = vmatprep.subr.bf16.mxu0 0
  %169 = vmatpush1.bf16.msra.mxu0 0
  %170 = vmatprep.subr.bf16.mxu0 0
  %171 = vmatpush1.bf16.msra.mxu0 0
  %172 = vmatprep.subr.bf16.mxu0 0
  %173 = vmatpush1.bf16.msra.mxu0 0
  %174 = vmatprep.subr.bf16.mxu0 0
  %175 = vmatpush1.bf16.msra.mxu0 0
  %176 = vmatprep.subr.bf16.mxu0 0
  %177 = vmatpush1.bf16.msra.mxu0 0
  %178 = vmatprep.subr.bf16.mxu0 0
  %179 = vmatpush1.bf16.msra.mxu0 0
  %180 = vmatprep.subr.bf16.mxu0 0
  %181 = vmatpush1.bf16.msra.mxu0 0
  %182 = vmatprep.mubr.bf16.mxu0 0
  %183 = vmatmul.mubr.bf16.gmra.mrb[0].mxu0 %v144
  %v184 = vpop.f32.mrb[0].mxu0
  %v185 = vadd.f32 0.0, %v184
  %v186 = vpop.f32.mrb[0].mxu0
  %v187 = vpop.f32.mrb[0].mxu0
  %v188 = vadd.f32 0.0, %v187
  %v189 = vpop.f32.mrb[0].mxu0
  %190 = vdwg.mxu0
  %vm191 = vcmp.ge.f32.partialorder %v185, 0.0
  %vm192 = vcmp.ge.f32.partialorder %v188, 0.0
  %v193 = vmul.f32 %v185, 0.2
  %v194 = vmul.f32 %v188, 0.2
  %v195 = vsel %vm191, %v185, %v193
  %v196 = vsel %vm192, %v188, %v194
  %v197 = vrot.slane %v195, 7
  %v198 = vrot.slane %v196, 7
  %v199 = vsel %vm92, %v197, %v198
  %v200 = vsel %vm92, %v198, %v197
  %v201 = vsel %vm97, 0.0, %v200
  %v202 = vsel %vm98, 0.0, %v199
  %v203 = vrot.slane %v195, 1
  %v204 = vrot.slane %v196, 1
  %v205 = vsel %vm103, %v203, %v204
  %v206 = vsel %vm103, %v204, %v203
  %v207 = vsel %vm108, 0.0, %v205
  %v208 = vsel %vm109, 0.0, %v206
  %211 = vrot.lane.b32.xlu0 %v195, 8
  %v212 = vpop.permute.xlu0 %211
  %213 = vrot.lane.b32.xlu0 %v196, 8
  %v214 = vpop.permute.xlu0 %213
  %219 = vrot.lane.b32.xlu0 %v207, 16
  %v220 = vpop.permute.xlu0 %219
  %221 = vrot.lane.b32.xlu0 %v208, 16
  %v222 = vpop.permute.xlu0 %221
  %v225 = vsel %vm131, %v201, %v212
  %v226 = vsel %vm131, %v202, %v214
  %vm227 = vcmask 130048
  %v228 = vsel %vm227, %v225, %v220
  %v229 = vsel %vm227, %v226, %v222
  %v230 = vpack.c.bf16 %v229, %v228
  %v231 = vld [vmem:[%s2] sm:$0xf]
  %v232 = vld [vmem:[%s2 + $0x4] sm:$0xf]
  %v233 = vld [vmem:[%s2 + $0x8] sm:$0xf]
  %v237 = vunpack.c.l.b16 %v231
  %v238 = vunpack.c.l.b16 %v232
  %v239 = vunpack.c.l.b16 %v233
  %v240 = vpack.c.b16 %v238, %v237
  %v241 = vpack.c.b16 %v239, %v239
  %vm243 = vcmask 195584
  %v245 = vsel %vm243, %v230, 0
  %vm247 = vcmask 1043456
  %v249 = vsel %vm247, %v241, 0
  %251 = vmatprep.subr.bf16.mxu0 0
  %252 = vmatpush1.bf16.msra.mxu0 %v240
  %253 = vmatprep.subr.bf16.mxu0 0
  %254 = vmatpush1.bf16.msra.mxu0 %v249
  %255 = vmatprep.subr.bf16.mxu0 0
  %256 = vmatpush1.bf16.msra.mxu0 0
  %257 = vmatprep.subr.bf16.mxu0 0
  %258 = vmatpush1.bf16.msra.mxu0 0
  %259 = vmatprep.subr.bf16.mxu0 0
  %260 = vmatpush1.bf16.msra.mxu0 0
  %261 = vmatprep.subr.bf16.mxu0 0
  %262 = vmatpush1.bf16.msra.mxu0 0
  %263 = vmatprep.subr.bf16.mxu0 0
  %264 = vmatpush1.bf16.msra.mxu0 0
  %265 = vmatprep.subr.bf16.mxu0 0
  %266 = vmatpush1.bf16.msra.mxu0 0
  %267 = vmatprep.subr.bf16.mxu0 0
  %268 = vmatpush1.bf16.msra.mxu0 0
  %269 = vmatprep.subr.bf16.mxu0 0
  %270 = vmatpush1.bf16.msra.mxu0 0
  %271 = vmatprep.subr.bf16.mxu0 0
  %272 = vmatpush1.bf16.msra.mxu0 0
  %273 = vmatprep.subr.bf16.mxu0 0
  %274 = vmatpush1.bf16.msra.mxu0 0
  %275 = vmatprep.subr.bf16.mxu0 0
  %276 = vmatpush1.bf16.msra.mxu0 0
  %277 = vmatprep.subr.bf16.mxu0 0
  %278 = vmatpush1.bf16.msra.mxu0 0
  %279 = vmatprep.subr.bf16.mxu0 0
  %280 = vmatpush1.bf16.msra.mxu0 0
  %281 = vmatprep.subr.bf16.mxu0 0
  %282 = vmatpush1.bf16.msra.mxu0 0
  %283 = vmatprep.mubr.bf16.mxu0 0
  %284 = vmatmul.mubr.bf16.gmra.mrb[0].mxu0 %v245
  %v285 = vpop.f32.mrb[0].mxu0
  %v286 = vadd.f32 0.0, %v285
  %v287 = vpop.f32.mrb[0].mxu0
  %v288 = vpop.f32.mrb[0].mxu0
  %v289 = vadd.f32 0.0, %v288
  %v290 = vpop.f32.mrb[0].mxu0
  %291 = vdwg.mxu0
  %v292 = vld [vmem:[%s6] sm:$0x1]
  %v293 = vld [vmem:[%s7] sm:$0x1]
  %v294 = vsel %vm227, %v286, 0.0
  %v295 = vsel %vm227, %v289, 0.0
  %v296 = vadd.f32 %v294, %v295
  %v297 = vrot.slane %v296, 4
  %v298 = vadd.f32 %v296, %v297
  %v299 = vrot.slane %v298, 2
  %v300 = vadd.f32 %v298, %v299
  %v301 = vrot.slane %v300, 1
  %v302 = vadd.f32 %v300, %v301
  %v303 = vmul.f32 %v302, 0.0625
  %v304 = vmul.f32 %v286, %v286
  %v305 = vmul.f32 %v289, %v289
  %v306 = vsel %vm227, %v304, 0.0
  %v307 = vsel %vm227, %v305, 0.0
  %v308 = vadd.f32 %v306, %v307
  %v309 = vrot.slane %v308, 4
  %v310 = vadd.f32 %v308, %v309
  %v311 = vrot.slane %v310, 2
  %v312 = vadd.f32 %v310, %v311
  %v313 = vrot.slane %v312, 1
  %v314 = vadd.f32 %v312, %v313
  %v315 = vmul.f32 %v314, 0.0625
  %v316 = vmul.f32 %v303, %v303
  %v317 = vsub.f32 %v315, %v316
  %v318 = vmax.f32 %v317, 0.0
  %v319 = vsub.f32 %v286, %v303
  %v320 = vsub.f32 %v289, %v303
  %v321 = vadd.f32 %v318, 1e-05
  %v322 = vrsqrt.pop %v321
  %v323 = vmul.f32 %v292, %v322
  %v325 = vlaneseq
  %v326 = vshrl.u32 %v325, 7
  %v327 = vsub.s32 0, %v326
  %v328 = vrot.slane %v323, %v327
  %v330 = vmul.f32 %v319, %v328
  %v331 = vmul.f32 %v320, %v328
  %v333 = vlaneseq
  %v334 = vshrl.u32 %v333, 7
  %v335 = vsub.s32 0, %v334
  %v336 = vrot.slane %v293, %v335
  %v338 = vadd.f32 %v330, %v336
  %v339 = vadd.f32 %v331, %v336
  %vm340 = vcmp.ge.f32.partialorder %v338, 0.0
  %vm341 = vcmp.ge.f32.partialorder %v339, 0.0
  %v342 = vmul.f32 %v338, 0.2
  %v343 = vmul.f32 %v339, 0.2
  %v344 = vsel %vm340, %v338, %v342
  %v345 = vsel %vm341, %v339, %v343
  %v346 = vrot.slane %v344, 7
  %v347 = vrot.slane %v345, 7
  %v348 = vsel %vm92, %v346, %v347
  %v349 = vsel %vm92, %v347, %v346
  %v350 = vsel %vm97, 0.0, %v349
  %v351 = vsel %vm98, 0.0, %v348
  %v352 = vrot.slane %v344, 1
  %v353 = vrot.slane %v345, 1
  %v354 = vsel %vm103, %v352, %v353
  %v355 = vsel %vm103, %v353, %v352
  %v356 = vsel %vm108, 0.0, %v354
  %v357 = vsel %vm109, 0.0, %v355
  %360 = vrot.lane.b32.xlu0 %v344, 16
  %v361 = vpop.permute.xlu0 %360
  %362 = vrot.lane.b32.xlu0 %v345, 16
  %v363 = vpop.permute.xlu0 %362
  %368 = vrot.lane.b32.xlu0 %v356, 32
  %v369 = vpop.permute.xlu0 %368
  %370 = vrot.lane.b32.xlu0 %v357, 32
  %v371 = vpop.permute.xlu0 %370
  %v374 = vsel %vm227, %v350, %v361
  %v375 = vsel %vm227, %v351, %v363
  %vm376 = vcmask 261120
  %v377 = vsel %vm376, %v374, %v369
  %v378 = vsel %vm376, %v375, %v371
  %v379 = vpack.c.bf16 %v378, %v377
  %v380 = vld [vmem:[%s3] sm:$0xf]
  %v381 = vld [vmem:[%s3 + $0x4] sm:$0xf]
  %v382 = vld [vmem:[%s3 + $0x8] sm:$0xf]
  %v383 = vld [vmem:[%s3 + $0xc] sm:$0xf]
  %v384 = vld [vmem:[%s3 + $0x10] sm:$0xf]
  %v385 = vld [vmem:[%s3 + $0x14] sm:$0xf]
  %v392 = vunpack.c.l.b16 %v380
  %v393 = vunpack.c.l.b16 %v381
  %v394 = vunpack.c.l.b16 %v382
  %v395 = vunpack.c.l.b16 %v383
  %v396 = vunpack.c.l.b16 %v384
  %v397 = vunpack.c.l.b16 %v385
  %v398 = vpack.c.b16 %v393, %v392
  %v399 = vpack.c.b16 %v395, %v394
  %v400 = vpack.c.b16 %v397, %v396
  %vm404 = vcmask 392192
  %v406 = vsel %vm404, %v379, 0
  %408 = vmatprep.subr.bf16.mxu0 0
  %409 = vmatpush1.bf16.msra.mxu0 %v398
  %410 = vmatprep.subr.bf16.mxu0 0
  %411 = vmatpush1.bf16.msra.mxu0 %v399
  %412 = vmatprep.subr.bf16.mxu0 0
  %413 = vmatpush1.bf16.msra.mxu0 %v400
  %414 = vmatprep.subr.bf16.mxu0 0
  %415 = vmatpush1.bf16.msra.mxu0 0
  %416 = vmatprep.subr.bf16.mxu0 0
  %417 = vmatpush1.bf16.msra.mxu0 0
  %418 = vmatprep.subr.bf16.mxu0 0
  %419 = vmatpush1.bf16.msra.mxu0 0
  %420 = vmatprep.subr.bf16.mxu0 0
  %421 = vmatpush1.bf16.msra.mxu0 0
  %422 = vmatprep.subr.bf16.mxu0 0
  %423 = vmatpush1.bf16.msra.mxu0 0
  %424 = vmatprep.subr.bf16.mxu0 0
  %425 = vmatpush1.bf16.msra.mxu0 0
  %426 = vmatprep.subr.bf16.mxu0 0
  %427 = vmatpush1.bf16.msra.mxu0 0
  %428 = vmatprep.subr.bf16.mxu0 0
  %429 = vmatpush1.bf16.msra.mxu0 0
  %430 = vmatprep.subr.bf16.mxu0 0
  %431 = vmatpush1.bf16.msra.mxu0 0
  %432 = vmatprep.subr.bf16.mxu0 0
  %433 = vmatpush1.bf16.msra.mxu0 0
  %434 = vmatprep.subr.bf16.mxu0 0
  %435 = vmatpush1.bf16.msra.mxu0 0
  %436 = vmatprep.subr.bf16.mxu0 0
  %437 = vmatpush1.bf16.msra.mxu0 0
  %438 = vmatprep.subr.bf16.mxu0 0
  %439 = vmatpush1.bf16.msra.mxu0 0
  %440 = vmatprep.mubr.bf16.mxu0 0
  %441 = vmatmul.mubr.bf16.gmra.mrb[0].mxu0 %v406
  %v442 = vpop.f32.mrb[0].mxu0
  %v443 = vadd.f32 0.0, %v442
  %v444 = vpop.f32.mrb[0].mxu0
  %v445 = vpop.f32.mrb[0].mxu0
  %v446 = vadd.f32 0.0, %v445
  %v447 = vpop.f32.mrb[0].mxu0
  %448 = vdwg.mxu0
  %v449 = vld [vmem:[%s8] sm:$0x1]
  %v450 = vld [vmem:[%s9] sm:$0x1]
  %v451 = vsel %vm376, %v443, 0.0
  %v452 = vsel %vm376, %v446, 0.0
  %v453 = vadd.f32 %v451, %v452
  %v454 = vrot.slane %v453, 4
  %v455 = vadd.f32 %v453, %v454
  %v456 = vrot.slane %v455, 2
  %v457 = vadd.f32 %v455, %v456
  %v458 = vrot.slane %v457, 1
  %v459 = vadd.f32 %v457, %v458
  %v460 = vmul.f32 %v459, 0.0625
  %v461 = vmul.f32 %v443, %v443
  %v462 = vmul.f32 %v446, %v446
  %v463 = vsel %vm376, %v461, 0.0
  %v464 = vsel %vm376, %v462, 0.0
  %v465 = vadd.f32 %v463, %v464
  %v466 = vrot.slane %v465, 4
  %v467 = vadd.f32 %v465, %v466
  %v468 = vrot.slane %v467, 2
  %v469 = vadd.f32 %v467, %v468
  %v470 = vrot.slane %v469, 1
  %v471 = vadd.f32 %v469, %v470
  %v472 = vmul.f32 %v471, 0.0625
  %v473 = vmul.f32 %v460, %v460
  %v474 = vsub.f32 %v472, %v473
  %v475 = vmax.f32 %v474, 0.0
  %v476 = vsub.f32 %v443, %v460
  %v477 = vsub.f32 %v446, %v460
  %v478 = vadd.f32 %v475, 1e-05
  %v479 = vrsqrt.pop %v478
  %v480 = vmul.f32 %v449, %v479
  %v482 = vlaneseq
  %v483 = vshrl.u32 %v482, 7
  %v484 = vsub.s32 0, %v483
  %v485 = vrot.slane %v480, %v484
  %v487 = vmul.f32 %v476, %v485
  %v488 = vmul.f32 %v477, %v485
  %v490 = vlaneseq
  %v491 = vshrl.u32 %v490, 7
  %v492 = vsub.s32 0, %v491
  %v493 = vrot.slane %v450, %v492
  %v495 = vadd.f32 %v487, %v493
  %v496 = vadd.f32 %v488, %v493
  %vm497 = vcmp.ge.f32.partialorder %v495, 0.0
  %vm498 = vcmp.ge.f32.partialorder %v496, 0.0
  %v499 = vmul.f32 %v495, 0.2
  %v500 = vmul.f32 %v496, 0.2
  %v501 = vsel %vm497, %v495, %v499
  %v502 = vsel %vm498, %v496, %v500
  %v503 = vrot.slane %v501, 7
  %v504 = vrot.slane %v502, 7
  %v505 = vsel %vm92, %v503, %v504
  %v506 = vsel %vm92, %v504, %v503
  %v507 = vsel %vm97, 0.0, %v506
  %v508 = vsel %vm98, 0.0, %v505
  %v509 = vrot.slane %v501, 1
  %v510 = vrot.slane %v502, 1
  %v511 = vsel %vm103, %v509, %v510
  %v512 = vsel %vm103, %v510, %v509
  %v513 = vsel %vm108, 0.0, %v511
  %v514 = vsel %vm109, 0.0, %v512
  %517 = vrot.lane.b32.xlu0 %v501, 32
  %v518 = vpop.permute.xlu0 %517
  %519 = vrot.lane.b32.xlu0 %v502, 32
  %v520 = vpop.permute.xlu0 %519
  %525 = vrot.lane.b32.xlu0 %v513, 64
  %v526 = vpop.permute.xlu0 %525
  %527 = vrot.lane.b32.xlu0 %v514, 64
  %v528 = vpop.permute.xlu0 %527
  %v531 = vsel %vm376, %v507, %v518
  %v532 = vsel %vm376, %v508, %v520
  %vm533 = vcmask 523264
  %v534 = vsel %vm533, %v531, %v526
  %v535 = vsel %vm533, %v532, %v528
  %v536 = vpack.c.bf16 %v535, %v534
  %v537 = vld [vmem:[%s4] sm:$0xf]
  %v538 = vld [vmem:[%s4 + $0x4] sm:$0xf]
  %v539 = vld [vmem:[%s4 + $0x8] sm:$0xf]
  %v540 = vld [vmem:[%s4 + $0xc] sm:$0xf]
  %v541 = vld [vmem:[%s4 + $0x10] sm:$0xf]
  %v542 = vld [vmem:[%s4 + $0x14] sm:$0xf]
  %v543 = vld [vmem:[%s4 + $0x18] sm:$0xf]
  %v544 = vld [vmem:[%s4 + $0x1c] sm:$0xf]
  %v545 = vld [vmem:[%s4 + $0x20] sm:$0xf]
  %v546 = vld [vmem:[%s4 + $0x24] sm:$0xf]
  %v547 = vld [vmem:[%s4 + $0x28] sm:$0xf]
  %v548 = vld [vmem:[%s4 + $0x2c] sm:$0xf]
  %v561 = vunpack.c.l.b16 %v537
  %v562 = vunpack.c.l.b16 %v538
  %v563 = vunpack.c.l.b16 %v539
  %v564 = vunpack.c.l.b16 %v540
  %v565 = vunpack.c.l.b16 %v541
  %v566 = vunpack.c.l.b16 %v542
  %v567 = vunpack.c.l.b16 %v543
  %v568 = vunpack.c.l.b16 %v544
  %v569 = vunpack.c.l.b16 %v545
  %v570 = vunpack.c.l.b16 %v546
  %v571 = vunpack.c.l.b16 %v547
  %v572 = vunpack.c.l.b16 %v548
  %v573 = vpack.c.b16 %v562, %v561
  %v574 = vpack.c.b16 %v564, %v563
  %v575 = vpack.c.b16 %v566, %v565
  %v576 = vpack.c.b16 %v568, %v567
  %v577 = vpack.c.b16 %v570, %v569
  %v578 = vpack.c.b16 %v572, %v571
  %vm585 = vcmask 785408
  %v587 = vsel %vm585, %v536, 0
  %589 = vmatprep.subr.bf16.mxu0 0
  %590 = vmatpush1.bf16.msra.mxu0 %v573
  %591 = vmatprep.subr.bf16.mxu0 0
  %592 = vmatpush1.bf16.msra.mxu0 %v574
  %593 = vmatprep.subr.bf16.mxu0 0
  %594 = vmatpush1.bf16.msra.mxu0 %v575
  %595 = vmatprep.subr.bf16.mxu0 0
  %596 = vmatpush1.bf16.msra.mxu0 %v576
  %597 = vmatprep.subr.bf16.mxu0 0
  %598 = vmatpush1.bf16.msra.mxu0 %v577
  %599 = vmatprep.subr.bf16.mxu0 0
  %600 = vmatpush1.bf16.msra.mxu0 %v578
  %601 = vmatprep.subr.bf16.mxu0 0
  %602 = vmatpush1.bf16.msra.mxu0 0
  %603 = vmatprep.subr.bf16.mxu0 0
  %604 = vmatpush1.bf16.msra.mxu0 0
  %605 = vmatprep.subr.bf16.mxu0 0
  %606 = vmatpush1.bf16.msra.mxu0 0
  %607 = vmatprep.subr.bf16.mxu0 0
  %608 = vmatpush1.bf16.msra.mxu0 0
  %609 = vmatprep.subr.bf16.mxu0 0
  %610 = vmatpush1.bf16.msra.mxu0 0
  %611 = vmatprep.subr.bf16.mxu0 0
  %612 = vmatpush1.bf16.msra.mxu0 0
  %613 = vmatprep.subr.bf16.mxu0 0
  %614 = vmatpush1.bf16.msra.mxu0 0
  %615 = vmatprep.subr.bf16.mxu0 0
  %616 = vmatpush1.bf16.msra.mxu0 0
  %617 = vmatprep.subr.bf16.mxu0 0
  %618 = vmatpush1.bf16.msra.mxu0 0
  %619 = vmatprep.subr.bf16.mxu0 0
  %620 = vmatpush1.bf16.msra.mxu0 0
  %621 = vmatprep.mubr.bf16.mxu0 0
  %622 = vmatmul.mubr.bf16.gmra.mrb[0].mxu0 %v587
  %v623 = vpop.f32.mrb[0].mxu0
  %v624 = vadd.f32 0.0, %v623
  %v625 = vpop.f32.mrb[0].mxu0
  %v626 = vpop.f32.mrb[0].mxu0
  %v627 = vadd.f32 0.0, %v626
  %v628 = vpop.f32.mrb[0].mxu0
  %629 = vdwg.mxu0
  %v630 = vld [vmem:[%s10] sm:$0x1]
  %v631 = vld [vmem:[%s11] sm:$0x1]
  %v632 = vsel %vm533, %v624, 0.0
  %v633 = vsel %vm533, %v627, 0.0
  %v634 = vadd.f32 %v632, %v633
  %v635 = vrot.slane %v634, 4
  %v636 = vadd.f32 %v634, %v635
  %v637 = vrot.slane %v636, 2
  %v638 = vadd.f32 %v636, %v637
  %v639 = vrot.slane %v638, 1
  %v640 = vadd.f32 %v638, %v639
  %v641 = vmul.f32 %v640, 0.0625
  %v642 = vmul.f32 %v624, %v624
  %v643 = vmul.f32 %v627, %v627
  %v644 = vsel %vm533, %v642, 0.0
  %v645 = vsel %vm533, %v643, 0.0
  %v646 = vadd.f32 %v644, %v645
  %v647 = vrot.slane %v646, 4
  %v648 = vadd.f32 %v646, %v647
  %v649 = vrot.slane %v648, 2
  %v650 = vadd.f32 %v648, %v649
  %v651 = vrot.slane %v650, 1
  %v652 = vadd.f32 %v650, %v651
  %v653 = vmul.f32 %v652, 0.0625
  %v654 = vmul.f32 %v641, %v641
  %v655 = vsub.f32 %v653, %v654
  %v656 = vmax.f32 %v655, 0.0
  %v657 = vsub.f32 %v624, %v641
  %v658 = vsub.f32 %v627, %v641
  %v659 = vadd.f32 %v656, 1e-05
  %v660 = vrsqrt.pop %v659
  %v661 = vmul.f32 %v630, %v660
  %v663 = vlaneseq
  %v664 = vshrl.u32 %v663, 7
  %v665 = vsub.s32 0, %v664
  %v666 = vrot.slane %v661, %v665
  %v668 = vmul.f32 %v657, %v666
  %v669 = vmul.f32 %v658, %v666
  %v671 = vlaneseq
  %v672 = vshrl.u32 %v671, 7
  %v673 = vsub.s32 0, %v672
  %v674 = vrot.slane %v631, %v673
  %v676 = vadd.f32 %v668, %v674
  %v677 = vadd.f32 %v669, %v674
  %vm678 = vcmp.ge.f32.partialorder %v676, 0.0
  %vm679 = vcmp.ge.f32.partialorder %v677, 0.0
  %v680 = vmul.f32 %v676, 0.2
  %v681 = vmul.f32 %v677, 0.2
  %v682 = vsel %vm678, %v676, %v680
  %v683 = vsel %vm679, %v677, %v681
  %v684 = vrot.slane %v682, 7
  %v685 = vrot.slane %v683, 7
  %v686 = vsel %vm92, %v684, %v685
  %v687 = vsel %vm92, %v685, %v684
  %v688 = vsel %vm97, 0.0, %v687
  %v689 = vsel %vm98, 0.0, %v686
  %v690 = vrot.slane %v682, 1
  %v691 = vrot.slane %v683, 1
  %v692 = vsel %vm103, %v690, %v691
  %v693 = vsel %vm103, %v691, %v690
  %v694 = vsel %vm108, 0.0, %v692
  %v695 = vsel %vm109, 0.0, %v693
  %698 = vrot.lane.b32.xlu0 %v682, 64
  %v699 = vpop.permute.xlu0 %698
  %700 = vrot.lane.b32.xlu0 %v683, 64
  %v701 = vpop.permute.xlu0 %700
  %v704 = vsel %vm533, %v688, %v699
  %v705 = vsel %vm533, %v689, %v701
  %v706 = vpack.c.bf16 %v705, %v704
  %v707 = vpack.c.bf16 %v695, %v694
  %v708 = vld [vmem:[%s5] sm:$0xf]
  %v709 = vld [vmem:[%s5 + $0x4] sm:$0xf]
  %v710 = vld [vmem:[%s5 + $0x8] sm:$0xf]
  %v711 = vld [vmem:[%s5 + $0xc] sm:$0xf]
  %v712 = vld [vmem:[%s5 + $0x10] sm:$0xf]
  %v713 = vld [vmem:[%s5 + $0x14] sm:$0xf]
  %v714 = vld [vmem:[%s5 + $0x18] sm:$0xf]
  %v715 = vld [vmem:[%s5 + $0x1c] sm:$0xf]
  %v716 = vld [vmem:[%s5 + $0x20] sm:$0xf]
  %v717 = vld [vmem:[%s5 + $0x24] sm:$0xf]
  %v718 = vld [vmem:[%s5 + $0x28] sm:$0xf]
  %v719 = vld [vmem:[%s5 + $0x2c] sm:$0xf]
  %v720 = vld [vmem:[%s5 + $0x30] sm:$0xf]
  %v721 = vld [vmem:[%s5 + $0x34] sm:$0xf]
  %v722 = vld [vmem:[%s5 + $0x38] sm:$0xf]
  %v723 = vld [vmem:[%s5 + $0x3c] sm:$0xf]
  %v724 = vld [vmem:[%s5 + $0x40] sm:$0xf]
  %v725 = vld [vmem:[%s5 + $0x44] sm:$0xf]
  %v726 = vld [vmem:[%s5 + $0x48] sm:$0xf]
  %v727 = vld [vmem:[%s5 + $0x4c] sm:$0xf]
  %v728 = vld [vmem:[%s5 + $0x50] sm:$0xf]
  %v729 = vld [vmem:[%s5 + $0x54] sm:$0xf]
  %v730 = vld [vmem:[%s5 + $0x58] sm:$0xf]
  %v731 = vld [vmem:[%s5 + $0x5c] sm:$0xf]
  %v756 = vunpack.c.l.b16 %v708
  %v757 = vunpack.c.l.b16 %v709
  %v758 = vunpack.c.l.b16 %v710
  %v759 = vunpack.c.l.b16 %v711
  %v760 = vunpack.c.l.b16 %v712
  %v761 = vunpack.c.l.b16 %v713
  %v762 = vunpack.c.l.b16 %v714
  %v763 = vunpack.c.l.b16 %v715
  %v764 = vunpack.c.l.b16 %v716
  %v765 = vunpack.c.l.b16 %v717
  %v766 = vunpack.c.l.b16 %v718
  %v767 = vunpack.c.l.b16 %v719
  %v768 = vunpack.c.l.b16 %v720
  %v769 = vunpack.c.l.b16 %v721
  %v770 = vunpack.c.l.b16 %v722
  %v771 = vunpack.c.l.b16 %v723
  %v772 = vunpack.c.l.b16 %v724
  %v773 = vunpack.c.l.b16 %v725
  %v774 = vunpack.c.l.b16 %v726
  %v775 = vunpack.c.l.b16 %v727
  %v776 = vunpack.c.l.b16 %v728
  %v777 = vunpack.c.l.b16 %v729
  %v778 = vunpack.c.l.b16 %v730
  %v779 = vunpack.c.l.b16 %v731
  %v780 = vpack.c.b16 %v757, %v756
  %v781 = vpack.c.b16 %v759, %v758
  %v782 = vpack.c.b16 %v761, %v760
  %v783 = vpack.c.b16 %v763, %v762
  %v784 = vpack.c.b16 %v765, %v764
  %v785 = vpack.c.b16 %v767, %v766
  %v786 = vpack.c.b16 %v769, %v768
  %v787 = vpack.c.b16 %v771, %v770
  %v788 = vpack.c.b16 %v773, %v772
  %v789 = vpack.c.b16 %v775, %v774
  %v790 = vpack.c.b16 %v777, %v776
  %v791 = vpack.c.b16 %v779, %v778
  %v805 = vsel %vm533, %v707, 0
  %807 = vmatprep.subr.bf16.mxu0 0
  %808 = vmatpush1.bf16.msra.mxu0 %v780
  %809 = vmatprep.subr.bf16.mxu0 0
  %810 = vmatpush1.bf16.msra.mxu0 %v781
  %811 = vmatprep.subr.bf16.mxu0 0
  %812 = vmatpush1.bf16.msra.mxu0 %v782
  %813 = vmatprep.subr.bf16.mxu0 0
  %814 = vmatpush1.bf16.msra.mxu0 %v783
  %815 = vmatprep.subr.bf16.mxu0 0
  %816 = vmatpush1.bf16.msra.mxu0 %v784
  %817 = vmatprep.subr.bf16.mxu0 0
  %818 = vmatpush1.bf16.msra.mxu0 %v785
  %819 = vmatprep.subr.bf16.mxu0 0
  %820 = vmatpush1.bf16.msra.mxu0 %v786
  %821 = vmatprep.subr.bf16.mxu0 0
  %822 = vmatpush1.bf16.msra.mxu0 %v787
  %823 = vmatprep.subr.bf16.mxu0 0
  %824 = vmatpush1.bf16.msra.mxu0 %v788
  %825 = vmatprep.subr.bf16.mxu0 0
  %826 = vmatpush1.bf16.msra.mxu0 %v789
  %827 = vmatprep.subr.bf16.mxu0 0
  %828 = vmatpush1.bf16.msra.mxu0 %v790
  %829 = vmatprep.subr.bf16.mxu0 0
  %830 = vmatpush1.bf16.msra.mxu0 %v791
  %831 = vmatprep.subr.bf16.mxu0 0
  %832 = vmatpush1.bf16.msra.mxu0 0
  %833 = vmatprep.subr.bf16.mxu0 0
  %834 = vmatpush1.bf16.msra.mxu0 0
  %835 = vmatprep.subr.bf16.mxu0 0
  %836 = vmatpush1.bf16.msra.mxu0 0
  %837 = vmatprep.subr.bf16.mxu0 0
  %838 = vmatpush1.bf16.msra.mxu0 0
  %839 = vmatprep.mubr.bf16.mxu0 %v805
  %840 = vmatmul.mubr.bf16.gmra.mrb[0].mxu0 %v706
  %v841 = vpop.f32.mrb[0].mxu0
  %v842 = vadd.f32 0.0, %v841
  %v843 = vpop.f32.mrb[0].mxu0
  %v844 = vpop.f32.mrb[0].mxu0
  %v845 = vadd.f32 0.0, %v844
  %v846 = vpop.f32.mrb[0].mxu0
  %847 = vdwg.mxu0
  %v848 = vld [vmem:[%s12] sm:$0x1]
  %v849 = vld [vmem:[%s13] sm:$0x1]
  %v850 = vadd.f32 %v842, %v845
  %v851 = vrot.slane %v850, 4
  %v852 = vadd.f32 %v850, %v851
  %v853 = vrot.slane %v852, 2
  %v854 = vadd.f32 %v852, %v853
  %v855 = vrot.slane %v854, 1
  %v856 = vadd.f32 %v854, %v855
  %v857 = vmul.f32 %v856, 0.0625
  %v858 = vmul.f32 %v842, %v842
  %v859 = vmul.f32 %v845, %v845
  %v860 = vadd.f32 %v858, %v859
  %v861 = vrot.slane %v860, 4
  %v862 = vadd.f32 %v860, %v861
  %v863 = vrot.slane %v862, 2
  %v864 = vadd.f32 %v862, %v863
  %v865 = vrot.slane %v864, 1
  %v866 = vadd.f32 %v864, %v865
  %v867 = vmul.f32 %v866, 0.0625
  %v868 = vmul.f32 %v857, %v857
  %v869 = vsub.f32 %v867, %v868
  %v870 = vmax.f32 %v869, 0.0
  %v871 = vsub.f32 %v842, %v857
  %v872 = vsub.f32 %v845, %v857
  %v873 = vadd.f32 %v870, 1e-05
  %v874 = vrsqrt.pop %v873
  %v875 = vmul.f32 %v848, %v874
  %v877 = vlaneseq
  %v878 = vshrl.u32 %v877, 7
  %v879 = vsub.s32 0, %v878
  %v880 = vrot.slane %v875, %v879
  %v882 = vmul.f32 %v871, %v880
  %v883 = vmul.f32 %v872, %v880
  %v885 = vlaneseq
  %v886 = vshrl.u32 %v885, 7
  %v887 = vsub.s32 0, %v886
  %v888 = vrot.slane %v849, %v887
  %v890 = vadd.f32 %v882, %v888
  %v891 = vadd.f32 %v883, %v888
  %vm892 = vcmp.ge.f32.partialorder %v890, 0.0
  %vm893 = vcmp.ge.f32.partialorder %v891, 0.0
  %v894 = vmul.f32 %v890, 0.2
  %v895 = vmul.f32 %v891, 0.2
  %v896 = vsel %vm892, %v890, %v894
  %v897 = vsel %vm893, %v891, %v895
  %898 = vxpose.xlu0.b32.start [1/16] %v896, 128
  %899 = vxpose.xlu0.b32.cont [2/16] 0.0, 128
  %900 = vxpose.xlu0.b32.cont [3/16] 0.0, 128
  %901 = vxpose.xlu0.b32.cont [4/16] 0.0, 128
  %902 = vxpose.xlu0.b32.cont [5/16] 0.0, 128
  %903 = vxpose.xlu0.b32.cont [6/16] 0.0, 128
  %904 = vxpose.xlu0.b32.cont [7/16] 0.0, 128
  %905 = vxpose.xlu0.b32.cont [8/16] 0.0, 128
  %906 = vxpose.xlu0.b32.cont [9/16] 0.0, 128
  %907 = vxpose.xlu0.b32.cont [10/16] 0.0, 128
  %908 = vxpose.xlu0.b32.cont [11/16] 0.0, 128
  %909 = vxpose.xlu0.b32.cont [12/16] 0.0, 128
  %910 = vxpose.xlu0.b32.cont [13/16] 0.0, 128
  %911 = vxpose.xlu0.b32.cont [14/16] 0.0, 128
  %912 = vxpose.xlu0.b32.cont [15/16] 0.0, 128
  %913 = vxpose.xlu0.b32.end [16/16] 0.0, 128
  %v914 = vpop.trf.xlu0
  %v915 = vpop.trf.xlu0
  %v916 = vpop.trf.xlu0
  %v917 = vpop.trf.xlu0
  %v918 = vpop.trf.xlu0
  %v919 = vpop.trf.xlu0
  %v920 = vpop.trf.xlu0
  %v921 = vpop.trf.xlu0
  %v922 = vpop.trf.xlu0
  %v923 = vpop.trf.xlu0
  %v924 = vpop.trf.xlu0
  %v925 = vpop.trf.xlu0
  %v926 = vpop.trf.xlu0
  %v927 = vpop.trf.xlu0
  %v928 = vpop.trf.xlu0
  %v929 = vpop.trf.xlu0
  %930 = vxpose.xlu0.b32.start [1/16] %v897, 128
  %931 = vxpose.xlu0.b32.cont [2/16] 0.0, 128
  %932 = vxpose.xlu0.b32.cont [3/16] 0.0, 128
  %933 = vxpose.xlu0.b32.cont [4/16] 0.0, 128
  %934 = vxpose.xlu0.b32.cont [5/16] 0.0, 128
  %935 = vxpose.xlu0.b32.cont [6/16] 0.0, 128
  %936 = vxpose.xlu0.b32.cont [7/16] 0.0, 128
  %937 = vxpose.xlu0.b32.cont [8/16] 0.0, 128
  %938 = vxpose.xlu0.b32.cont [9/16] 0.0, 128
  %939 = vxpose.xlu0.b32.cont [10/16] 0.0, 128
  %940 = vxpose.xlu0.b32.cont [11/16] 0.0, 128
  %941 = vxpose.xlu0.b32.cont [12/16] 0.0, 128
  %942 = vxpose.xlu0.b32.cont [13/16] 0.0, 128
  %943 = vxpose.xlu0.b32.cont [14/16] 0.0, 128
  %944 = vxpose.xlu0.b32.cont [15/16] 0.0, 128
  %945 = vxpose.xlu0.b32.end [16/16] 0.0, 128
  %v946 = vpop.trf.xlu0
  %v947 = vpop.trf.xlu0
  %v948 = vpop.trf.xlu0
  %v949 = vpop.trf.xlu0
  %v950 = vpop.trf.xlu0
  %v951 = vpop.trf.xlu0
  %v952 = vpop.trf.xlu0
  %v953 = vpop.trf.xlu0
  %v954 = vpop.trf.xlu0
  %v955 = vpop.trf.xlu0
  %v956 = vpop.trf.xlu0
  %v957 = vpop.trf.xlu0
  %v958 = vpop.trf.xlu0
  %v959 = vpop.trf.xlu0
  %v960 = vpop.trf.xlu0
  %v961 = vpop.trf.xlu0
  %962 = vst.msk [vmem:[%s17] sm:$0xff] %vm131, %v914
  %963 = vst.msk [vmem:[%s17 + $0x8] sm:$0xff] %vm131, %v915
  %964 = vst.msk [vmem:[%s17 + $0x10] sm:$0xff] %vm131, %v916
  %965 = vst.msk [vmem:[%s17 + $0x18] sm:$0xff] %vm131, %v917
  %966 = vst.msk [vmem:[%s17 + $0x20] sm:$0xff] %vm131, %v918
  %967 = vst.msk [vmem:[%s17 + $0x28] sm:$0xff] %vm131, %v919
  %968 = vst.msk [vmem:[%s17 + $0x30] sm:$0xff] %vm131, %v920
  %969 = vst.msk [vmem:[%s17 + $0x38] sm:$0xff] %vm131, %v921
  %970 = vst.msk [vmem:[%s17 + $0x40] sm:$0xff] %vm131, %v922
  %971 = vst.msk [vmem:[%s17 + $0x48] sm:$0xff] %vm131, %v923
  %972 = vst.msk [vmem:[%s17 + $0x50] sm:$0xff] %vm131, %v924
  %973 = vst.msk [vmem:[%s17 + $0x58] sm:$0xff] %vm131, %v925
  %974 = vst.msk [vmem:[%s17 + $0x60] sm:$0xff] %vm131, %v926
  %975 = vst.msk [vmem:[%s17 + $0x68] sm:$0xff] %vm131, %v927
  %976 = vst.msk [vmem:[%s17 + $0x70] sm:$0xff] %vm131, %v928
  %977 = vst.msk [vmem:[%s17 + $0x78] sm:$0xff] %vm131, %v929
  %978 = vst.msk [vmem:[%s17 + $0x80] sm:$0xff] %vm131, %v946
  %979 = vst.msk [vmem:[%s17 + $0x88] sm:$0xff] %vm131, %v947
  %980 = vst.msk [vmem:[%s17 + $0x90] sm:$0xff] %vm131, %v948
  %981 = vst.msk [vmem:[%s17 + $0x98] sm:$0xff] %vm131, %v949
  %982 = vst.msk [vmem:[%s17 + $0xa0] sm:$0xff] %vm131, %v950
  %983 = vst.msk [vmem:[%s17 + $0xa8] sm:$0xff] %vm131, %v951
  %984 = vst.msk [vmem:[%s17 + $0xb0] sm:$0xff] %vm131, %v952
  %985 = vst.msk [vmem:[%s17 + $0xb8] sm:$0xff] %vm131, %v953
  %986 = vst.msk [vmem:[%s17 + $0xc0] sm:$0xff] %vm131, %v954
  %987 = vst.msk [vmem:[%s17 + $0xc8] sm:$0xff] %vm131, %v955
  %988 = vst.msk [vmem:[%s17 + $0xd0] sm:$0xff] %vm131, %v956
  %989 = vst.msk [vmem:[%s17 + $0xd8] sm:$0xff] %vm131, %v957
  %990 = vst.msk [vmem:[%s17 + $0xe0] sm:$0xff] %vm131, %v958
  %991 = vst.msk [vmem:[%s17 + $0xe8] sm:$0xff] %vm131, %v959
  %992 = vst.msk [vmem:[%s17 + $0xf0] sm:$0xff] %vm131, %v960
  %993 = vst.msk [vmem:[%s17 + $0xf8] sm:$0xff] %vm131, %v961
  %v994 = vld [vmem:[%s14] sm:$0xff]
  %v995 = vmul.f32 %v896, %v994
  %v996 = vmul.f32 %v897, %v994
  %997 = vadd.xlane.f32.xlu0 %v995
  %v998 = vpop.xlane.xlu0 %997
  %999 = vadd.xlane.f32.xlu0 %v996
  %v1000 = vpop.xlane.xlu0 %999
  %v1003 = vlaneseq
  %v1004 = vand.u32 %v1003, 127
  %v1005 = vlaneseq
  %v1006 = vshrl.u32 %v1005, 7
  %v1007 = vsub.s32 %v1004, %v1006
  %v1008 = vrot.slane %v998, %v1007
  %v1009 = vlaneseq
  %v1010 = vshrl.u32 %v1009, 7
  %v1011 = vsub.s32 %v1004, %v1010
  %v1012 = vrot.slane %v1000, %v1011
  %vm1013 = vcmask 1041409
  %v1014 = vsel %vm1013, %v1012, %v1008
  %vm1016 = vcmask 58368
  %v1017 = vsel %vm1016, %v1014, 0.0
  %1018 = vadd.xlane.f32.xlu0 %v1017
  %v1019 = vpop.xlane.xlu0 %1018
  %s1020 = sld [smem:[#allocation2]]
  %v1021 = vstv %s1020
  %v1022 = vadd.f32 %v1019, %v1021
  %v1023 = vsub.f32 0.0, %v1022
  %v1024 = vmul.f32 %v1023, 1.442695
  %v1025 = vpow.pop %v1024
  %v1026 = vadd.f32 %v1025, 1.0
  %v1027 = vrcp.pop %v1026
  %vm1028 = vcmask 1024
  %1029 = vst.msk [vmem:[%s16] sm:$0x3] %vm1028, %v1027
  // Predicated region
  $region66: #{tpu_custom_call.1} parent=0 // pred_check
    _
  $region67: #{tpu_custom_call.1} parent=0 // pred_check_branch
    %1031 = sbr.rel (0) target = $region69
  $region68: #{tpu_custom_call.1} parent=0 // pred_region
    _
  $region69: #{tpu_custom_call.1} parent=0 // pred_fallthru
    _
  // Predicated region
  $region70: #{tpu_custom_call.1} parent=0 // pred_check
    _
  $region71: #{tpu_custom_call.1} parent=0 // pred_check_branch
    %1033 = sbr.rel (0) target = $region73
  $region72: #{tpu_custom_call.1} parent=0 // pred_region
    _
  $region73: #{tpu_custom_call.1} parent=0 // pred_fallthru
    _
  // Predicated region
  $region74: #{tpu_custom_call.1} parent=0 // pred_check
    _
  $region75: #{tpu_custom_call.1} parent=0 // pred_check_branch
    %1035 = sbr.rel (0) target = $region77
  $region76: #{tpu_custom_call.1} parent=0 // pred_region
    _
  $region77: #{tpu_custom_call.1} parent=0 // pred_fallthru
    _
  // Predicated region
  $region78: #{tpu_custom_call.1} parent=0 // pred_check
    _
  $region79: #{tpu_custom_call.1} parent=0 // pred_check_branch
    %1037 = sbr.rel (0) target = $region81
  $region80: #{tpu_custom_call.1} parent=0 // pred_region
    _
  $region81: #{tpu_custom_call.1} parent=0 // pred_fallthru
    _

</llo_original>
